<compile_context>
chip_gen: v5e
topology: v5e:2x2
jax: 0.10.0
libtpu: 0.0.40
codegen_flags: <defaults>
</compile_context>

<pallas_src>
import jax
import jax.numpy as jnp
from jax.experimental import pallas as pl
from jax.experimental.pallas import tpu as pltpu

NEG_SLOPE = 0.01  # torch.nn.LeakyReLU default negative_slope


def _leaky(x):
    return jnp.where(x >= 0, x, NEG_SLOPE * x)


def _round_up(n, m):
    return ((n + m - 1) // m) * m


def _flatten_conv_weight(w, cin_r):
    """(Cout, Cin, K) -> (Cout, K*cin_r), tap-major, zero-padded so that each
    tap's Cin rows start at a sublane-aligned offset in the stacked RHS."""
    cout, cin, K = w.shape
    wt = jnp.transpose(w, (0, 2, 1))                      # (Cout, K, Cin)
    wt = jnp.pad(wt, ((0, 0), (0, 0), (0, cin_r - cin)))  # zero cols for pad rows
    return wt.reshape(cout, K * cin_r)


# ---------------------------------------------------------------------------
# Fused whole-network kernel: all CausalConvolutionBlocks for one batch
# element per grid step.  Activations stay resident in VMEM across layers.
# ---------------------------------------------------------------------------
def make_cnn_kernel(cfgs, L, K, ALIGN, Cmax, Crmax):
    """cfgs: list of (cin, cout, dilation, identity_residual)."""
    n_param_refs = sum(4 + (0 if ident else 2) for (_, _, _, ident) in cfgs)

    def kernel(*args):
        x_ref = args[0]
        p_refs = args[1:1 + n_param_refs]
        out_ref = args[1 + n_param_refs]
        pad_ref = args[2 + n_param_refs]   # (Cmax, ALIGN + L) causal-padded act
        stk_ref = args[3 + n_param_refs]   # (K*Crmax, L) stacked taps (matmul RHS)

        # Zero the causal left-pad strip once (it stays zero: activation stores
        # only touch columns >= ALIGN) and zero the tap stack once so the
        # sublane-padding rows contribute exactly 0 to the fused matmul.
        pad_ref[:, 0:ALIGN] = jnp.zeros((Cmax, ALIGN), jnp.float32)
        stk_ref[...] = jnp.zeros((K * Crmax, L), jnp.float32)

        def causal_conv(x, cin, cout, w_ref, b_ref, d):
            """Causal dilated conv == single (cout, K*cin_r)@(K*cin_r, L) matmul."""
            pad = (K - 1) * d
            cin_r = _round_up(cin, 8)
            # Lane-aligned store of the activation into the padded scratch
            # (ALIGN is a multiple of 128 -> unmasked, lane-dense store).
            pad_ref[0:cin, ALIGN:ALIGN + L] = x
            base = ALIGN - pad
            for j in range(K):
                if j == K - 1:
                    tap = x                                  # zero shift: reuse value
                else:
                    tap = pad_ref[0:cin, base + j * d: base + j * d + L]
                # sublane-aligned offsets (cin_r is a multiple of 8)
                stk_ref[j * cin_r: j * cin_r + cin, :] = tap
            y = jnp.dot(w_ref[...], stk_ref[0:K * cin_r, :],
                        preferred_element_type=jnp.float32)
            return y + b_ref[...]

        x = x_ref[...]                   # (Cin0, L) — resident across all layers
        idx = 0
        for (cin, cout, d, ident) in cfgs:
            w1, b1, w2, b2 = p_refs[idx:idx + 4]
            idx += 4
            h = _leaky(causal_conv(x, cin, cout, w1, b1, d))
            h = _leaky(causal_conv(h, cout, cout, w2, b2, d))
            if ident:
                x = h + x                # identity residual: pure VPU add (no eye matmul)
            else:
                wres, bres = p_refs[idx:idx + 2]
                idx += 2
                x = h + jnp.dot(wres[...], x,
                                preferred_element_type=jnp.float32) + bres[...]
        out_ref[...] = x.astype(out_ref.dtype)

    return kernel


def causal_cnn_pallas(x, params):
    # x: (N, C_in, L) -- NCL, as in PyTorch.
    # TODO(synk): for very long L on v7x (64 MiB VMEM), add an L-tiling grid
    # axis with a per-layer (K-1)*dil halo instead of full-L blocks.
    N, Cin0, L = x.shape
    K = params[0]['K']
    cfgs = [(p['cin'], p['cout'], p['dil'], p['identity']) for p in params]
    maxpad = max((K - 1) * d for (_, _, d, _) in cfgs)
    ALIGN = max(128, _round_up(maxpad, 128))          # lane-aligned causal pad
    Cmax = max(max(cin, cout) for (cin, cout, _, _) in cfgs)
    Crmax = max(_round_up(c, 8) for (cin, cout, _, _) in cfgs for c in (cin, cout))
    Cout_last = cfgs[-1][1]

    inputs = [x]
    in_specs = [pl.BlockSpec((None, Cin0, L), lambda b: (b, 0, 0))]

    def add_full2d(arr):
        inputs.append(arr)
        in_specs.append(pl.BlockSpec(arr.shape, lambda b: (0, 0)))

    for p in params:
        cin, cout = p['cin'], p['cout']
        add_full2d(_flatten_conv_weight(p['w1'], _round_up(cin, 8)))
        add_full2d(p['b1'][:, None])
        add_full2d(_flatten_conv_weight(p['w2'], _round_up(cout, 8)))
        add_full2d(p['b2'][:, None])
        if not p['identity']:
            add_full2d(p['wres'])
            add_full2d(p['bres'][:, None])

    kernel = make_cnn_kernel(cfgs, L, K, ALIGN, Cmax, Crmax)
    return pl.pallas_call(
        kernel,
        out_shape=jax.ShapeDtypeStruct((N, Cout_last, L), jnp.float32),
        grid=(N,),
        in_specs=in_specs,
        out_specs=pl.BlockSpec((None, Cout_last, L), lambda b: (b, 0, 0)),
        scratch_shapes=[
            pltpu.VMEM((Cmax, ALIGN + L), jnp.float32),   # causal-padded activation
            pltpu.VMEM((K * Crmax, L), jnp.float32),      # stacked taps (fused RHS)
        ],
        compiler_params=pltpu.CompilerParams(
            dimension_semantics=("parallel",),            # shard batch over TCs (v7x)
            vmem_limit_bytes=32 * 1024 * 1024),
    )(*inputs)


# ---------------------------------------------------------------------------
# Parameter construction (deterministic, synthetic).
# torch.nn.utils.weight_norm at init: w = g * v/||v|| with g = ||v||  =>  w == v,
# so we use v directly (no wasted normalize/denormalize compute).
# ---------------------------------------------------------------------------
def init_causal_cnn_params(key, in_channels, channels, depth, out_channels, K):
    cfgs = []
    dil = 1
    for i in range(depth):
        cin = in_channels if i == 0 else channels
        cfgs.append((cin, channels, dil))
        dil *= 2
    cfgs.append((channels, out_channels, dil))

    params = []
    for (cin, cout, d) in cfgs:
        key, k1, k2, k3, k4, k5, k6 = jax.random.split(key, 7)
        w1 = 0.3 * jax.random.normal(k1, (cout, cin, K), jnp.float32)
        b1 = 0.1 * jax.random.normal(k2, (cout,), jnp.float32)
        w2 = 0.3 * jax.random.normal(k3, (cout, cout, K), jnp.float32)
        b2 = 0.1 * jax.random.normal(k4, (cout,), jnp.float32)
        identity = (cin == cout)
        if identity:
            wres, bres = None, None     # residual is a plain add in the kernel
        else:                            # upordownsample = Conv1d(cin, cout, 1)
            wres = 0.3 * jax.random.normal(k5, (cout, cin), jnp.float32)
            bres = 0.1 * jax.random.normal(k6, (cout,), jnp.float32)
        params.append(dict(w1=w1, b1=b1, w2=w2, b2=b2, wres=wres, bres=bres,
                           cin=cin, cout=cout, dil=d, K=K, identity=identity))
    return params


# ---------------------------------------------------------------------------
# Pure-JAX reference (for correctness check only).
# ---------------------------------------------------------------------------
def _causal_conv1d_ref(x, w, b, d):
    pad = (w.shape[-1] - 1) * d
    y = jax.lax.conv_general_dilated(
        x, w, window_strides=(1,), padding=[(pad, 0)], rhs_dilation=(d,),
        dimension_numbers=('NCH', 'OIH', 'NCH'))
    return y + b[None, :, None]


def causal_cnn_ref(x, params):
    for p in params:
        h = _leaky(_causal_conv1d_ref(x, p['w1'], p['b1'], p['dil']))
        h = _leaky(_causal_conv1d_ref(h, p['w2'], p['b2'], p['dil']))
        if p['identity']:
            res = x
        else:
            res = jnp.einsum('oc,ncl->nol', p['wres'], x) + p['bres'][None, :, None]
        x = h + res
    return x


if __name__ == "__main__":
    key = jax.random.PRNGKey(0)
    kx, kp = jax.random.split(key)
    N, Cin, L = 2, 4, 16
    channels, depth, Cout, K = 16, 2, 8, 3

    x = jax.random.normal(kx, (N, Cin, L), jnp.float32)
    params = init_causal_cnn_params(kp, Cin, channels, depth, Cout, K)

    out = jax.block_until_ready(causal_cnn_pallas(x, params))
    ref = causal_cnn_ref(x, params)

    assert out.shape == (N, Cout, L), out.shape
    assert jnp.allclose(out, ref, atol=2e-3, rtol=2e-3), \
        float(jnp.max(jnp.abs(out - ref)))
    print("KERNEL_OK")
</pallas_src>

<mosaic_0001>
module attributes {stable_mosaic.version = 11 : i64} {
  func.func @kernel(%arg0: i32, %arg1: memref<1x4x16xf32, #tpu.memory_space<vmem>>, %arg2: memref<16x24xf32, #tpu.memory_space<vmem>>, %arg3: memref<16x1xf32, #tpu.memory_space<vmem>>, %arg4: memref<16x48xf32, #tpu.memory_space<vmem>>, %arg5: memref<16x1xf32, #tpu.memory_space<vmem>>, %arg6: memref<16x4xf32, #tpu.memory_space<vmem>>, %arg7: memref<16x1xf32, #tpu.memory_space<vmem>>, %arg8: memref<16x48xf32, #tpu.memory_space<vmem>>, %arg9: memref<16x1xf32, #tpu.memory_space<vmem>>, %arg10: memref<16x48xf32, #tpu.memory_space<vmem>>, %arg11: memref<16x1xf32, #tpu.memory_space<vmem>>, %arg12: memref<8x48xf32, #tpu.memory_space<vmem>>, %arg13: memref<8x1xf32, #tpu.memory_space<vmem>>, %arg14: memref<8x24xf32, #tpu.memory_space<vmem>>, %arg15: memref<8x1xf32, #tpu.memory_space<vmem>>, %arg16: memref<8x16xf32, #tpu.memory_space<vmem>>, %arg17: memref<8x1xf32, #tpu.memory_space<vmem>>, %arg18: memref<1x8x16xf32, #tpu.memory_space<vmem>>, %arg19: memref<16x144xf32, #tpu.memory_space<vmem>>, %arg20: memref<48x16xf32, #tpu.memory_space<vmem>>) attributes {dimension_semantics = [#tpu.dimension_semantics<parallel>], iteration_bounds = array<i64: 2>, scalar_prefetch = 0 : i64, scratch_operands = 2 : i64, tpu.core_type = #tpu.core_type<tc>, window_params = [{transform_indices = @transform_0, window_bounds = array<i64: 1, 4, 16>}, {pipeline_mode = #tpu.pipeline_mode<synchronous>, transform_indices = @transform_1, window_bounds = array<i64: 16, 24>}, {pipeline_mode = #tpu.pipeline_mode<synchronous>, transform_indices = @transform_2, window_bounds = array<i64: 16, 1>}, {pipeline_mode = #tpu.pipeline_mode<synchronous>, transform_indices = @transform_3, window_bounds = array<i64: 16, 48>}, {pipeline_mode = #tpu.pipeline_mode<synchronous>, transform_indices = @transform_4, window_bounds = array<i64: 16, 1>}, {pipeline_mode = #tpu.pipeline_mode<synchronous>, transform_indices = @transform_5, window_bounds = array<i64: 16, 4>}, {pipeline_mode = #tpu.pipeline_mode<synchronous>, transform_indices = @transform_6, window_bounds = array<i64: 16, 1>}, {pipeline_mode = #tpu.pipeline_mode<synchronous>, transform_indices = @transform_7, window_bounds = array<i64: 16, 48>}, {pipeline_mode = #tpu.pipeline_mode<synchronous>, transform_indices = @transform_8, window_bounds = array<i64: 16, 1>}, {pipeline_mode = #tpu.pipeline_mode<synchronous>, transform_indices = @transform_9, window_bounds = array<i64: 16, 48>}, {pipeline_mode = #tpu.pipeline_mode<synchronous>, transform_indices = @transform_10, window_bounds = array<i64: 16, 1>}, {pipeline_mode = #tpu.pipeline_mode<synchronous>, transform_indices = @transform_11, window_bounds = array<i64: 8, 48>}, {pipeline_mode = #tpu.pipeline_mode<synchronous>, transform_indices = @transform_12, window_bounds = array<i64: 8, 1>}, {pipeline_mode = #tpu.pipeline_mode<synchronous>, transform_indices = @transform_13, window_bounds = array<i64: 8, 24>}, {pipeline_mode = #tpu.pipeline_mode<synchronous>, transform_indices = @transform_14, window_bounds = array<i64: 8, 1>}, {pipeline_mode = #tpu.pipeline_mode<synchronous>, transform_indices = @transform_15, window_bounds = array<i64: 8, 16>}, {pipeline_mode = #tpu.pipeline_mode<synchronous>, transform_indices = @transform_16, window_bounds = array<i64: 8, 1>}, {transform_indices = @transform_17, window_bounds = array<i64: 1, 8, 16>}]} {
    %cst = arith.constant 0.000000e+00 : f32
    %0 = vector.broadcast %cst : f32 to vector<16x128xf32>
    %c0 = arith.constant 0 : index
    %c0_0 = arith.constant 0 : index
    %1 = vector.load %arg19[%c0, %c0_0] : memref<16x144xf32, #tpu.memory_space<vmem>>, vector<16x128xf32>
    tpu.vector_store %arg19[%c0, %c0_0], %0 {strides = array<i32>} : memref<16x144xf32, #tpu.memory_space<vmem>>, vector<16x128xf32>,
    %cst_1 = arith.constant 0.000000e+00 : f32
    %2 = vector.broadcast %cst_1 : f32 to vector<48x16xf32>
    %c0_2 = arith.constant 0 : index
    %c0_3 = arith.constant 0 : index
    %3 = vector.load %arg20[%c0_2, %c0_3] : memref<48x16xf32, #tpu.memory_space<vmem>>, vector<48x16xf32>
    tpu.vector_store %arg20[%c0_2, %c0_3], %2 {strides = array<i32>} : memref<48x16xf32, #tpu.memory_space<vmem>>, vector<48x16xf32>,
    %c0_4 = arith.constant 0 : index
    %c0_5 = arith.constant 0 : index
    %c0_6 = arith.constant 0 : index
    %4 = vector.load %arg1[%c0_4, %c0_5, %c0_6] : memref<1x4x16xf32, #tpu.memory_space<vmem>>, vector<1x4x16xf32>
    %5 = vector.shape_cast %4 : vector<1x4x16xf32> to vector<4x16xf32>
    %c0_7 = arith.constant 0 : index
    %c128 = arith.constant 128 : index
    %6 = vector.load %arg19[%c0_7, %c128] : memref<16x144xf32, #tpu.memory_space<vmem>>, vector<4x16xf32>
    tpu.vector_store %arg19[%c0_7, %c128], %5 {strides = array<i32>} : memref<16x144xf32, #tpu.memory_space<vmem>>, vector<4x16xf32>,
    %c0_8 = arith.constant 0 : index
    %c126 = arith.constant 126 : index
    %7 = vector.load %arg19[%c0_8, %c126] : memref<16x144xf32, #tpu.memory_space<vmem>>, vector<4x16xf32>
    %c0_9 = arith.constant 0 : index
    %c0_10 = arith.constant 0 : index
    %8 = vector.load %arg20[%c0_9, %c0_10] : memref<48x16xf32, #tpu.memory_space<vmem>>, vector<4x16xf32>
    tpu.vector_store %arg20[%c0_9, %c0_10], %7 {strides = array<i32>} : memref<48x16xf32, #tpu.memory_space<vmem>>, vector<4x16xf32>,
    %c0_11 = arith.constant 0 : index
    %c127 = arith.constant 127 : index
    %9 = vector.load %arg19[%c0_11, %c127] : memref<16x144xf32, #tpu.memory_space<vmem>>, vector<4x16xf32>
    %c8 = arith.constant 8 : index
    %c0_12 = arith.constant 0 : index
    %10 = vector.load %arg20[%c8, %c0_12] : memref<48x16xf32, #tpu.memory_space<vmem>>, vector<4x16xf32>
    tpu.vector_store %arg20[%c8, %c0_12], %9 {strides = array<i32>} : memref<48x16xf32, #tpu.memory_space<vmem>>, vector<4x16xf32>,
    %c16 = arith.constant 16 : index
    %c0_13 = arith.constant 0 : index
    %11 = vector.load %arg20[%c16, %c0_13] : memref<48x16xf32, #tpu.memory_space<vmem>>, vector<4x16xf32>
    tpu.vector_store %arg20[%c16, %c0_13], %5 {strides = array<i32>} : memref<48x16xf32, #tpu.memory_space<vmem>>, vector<4x16xf32>,
    %c0_14 = arith.constant 0 : index
    %c0_15 = arith.constant 0 : index
    %12 = vector.load %arg2[%c0_14, %c0_15] : memref<16x24xf32, #tpu.memory_space<vmem>>, vector<16x24xf32>
    %c0_16 = arith.constant 0 : index
    %c0_17 = arith.constant 0 : index
    %13 = vector.load %arg20[%c0_16, %c0_17] : memref<48x16xf32, #tpu.memory_space<vmem>>, vector<24x16xf32>
    %cst_18 = arith.constant dense<0.000000e+00> : vector<16x16xf32>
    %14 = tpu.matmul %12, %13, %cst_18 {dimension_numbers = #tpu.dot_dimension_numbers<[1], [0], [0], [1], [0, 0, 1, 1], [], []>} : vector<16x24xf32>, vector<24x16xf32>, vector<16x16xf32> -> vector<16x16xf32>
    %c0_19 = arith.constant 0 : index
    %c0_20 = arith.constant 0 : index
    %15 = vector.load %arg3[%c0_19, %c0_20] : memref<16x1xf32, #tpu.memory_space<vmem>>, vector<16x1xf32>
    %16 = vector.broadcast %15 : vector<16x1xf32> to vector<16x16xf32>
    %17 = arith.addf %14, %16 : vector<16x16xf32>
    %cst_21 = arith.constant 0.000000e+00 : f32
    %18 = vector.broadcast %cst_21 : f32 to vector<16x16xf32>
    %19 = arith.cmpf oge, %17, %18 : vector<16x16xf32>
    %cst_22 = arith.constant 0.00999999977 : f32
    %20 = vector.broadcast %cst_22 : f32 to vector<16x16xf32>
    %21 = arith.mulf %20, %17 : vector<16x16xf32>
    %22 = arith.select %19, %17, %21 : vector<16x16xi1>, vector<16x16xf32>
    %c0_23 = arith.constant 0 : index
    %c128_24 = arith.constant 128 : index
    %23 = vector.load %arg19[%c0_23, %c128_24] : memref<16x144xf32, #tpu.memory_space<vmem>>, vector<16x16xf32>
    tpu.vector_store %arg19[%c0_23, %c128_24], %22 {strides = array<i32>} : memref<16x144xf32, #tpu.memory_space<vmem>>, vector<16x16xf32>,
    %c0_25 = arith.constant 0 : index
    %c126_26 = arith.constant 126 : index
    %24 = vector.load %arg19[%c0_25, %c126_26] : memref<16x144xf32, #tpu.memory_space<vmem>>, vector<16x16xf32>
    %c0_27 = arith.constant 0 : index
    %c0_28 = arith.constant 0 : index
    %25 = vector.load %arg20[%c0_27, %c0_28] : memref<48x16xf32, #tpu.memory_space<vmem>>, vector<16x16xf32>
    tpu.vector_store %arg20[%c0_27, %c0_28], %24 {strides = array<i32>} : memref<48x16xf32, #tpu.memory_space<vmem>>, vector<16x16xf32>,
    %c0_29 = arith.constant 0 : index
    %c127_30 = arith.constant 127 : index
    %26 = vector.load %arg19[%c0_29, %c127_30] : memref<16x144xf32, #tpu.memory_space<vmem>>, vector<16x16xf32>
    %c16_31 = arith.constant 16 : index
    %c0_32 = arith.constant 0 : index
    %27 = vector.load %arg20[%c16_31, %c0_32] : memref<48x16xf32, #tpu.memory_space<vmem>>, vector<16x16xf32>
    tpu.vector_store %arg20[%c16_31, %c0_32], %26 {strides = array<i32>} : memref<48x16xf32, #tpu.memory_space<vmem>>, vector<16x16xf32>,
    %c32 = arith.constant 32 : index
    %c0_33 = arith.constant 0 : index
    %28 = vector.load %arg20[%c32, %c0_33] : memref<48x16xf32, #tpu.memory_space<vmem>>, vector<16x16xf32>
    tpu.vector_store %arg20[%c32, %c0_33], %22 {strides = array<i32>} : memref<48x16xf32, #tpu.memory_space<vmem>>, vector<16x16xf32>,
    %c0_34 = arith.constant 0 : index
    %c0_35 = arith.constant 0 : index
    %29 = vector.load %arg4[%c0_34, %c0_35] : memref<16x48xf32, #tpu.memory_space<vmem>>, vector<16x48xf32>
    %c0_36 = arith.constant 0 : index
    %c0_37 = arith.constant 0 : index
    %30 = vector.load %arg20[%c0_36, %c0_37] : memref<48x16xf32, #tpu.memory_space<vmem>>, vector<48x16xf32>
    %cst_38 = arith.constant dense<0.000000e+00> : vector<16x16xf32>
    %31 = tpu.matmul %29, %30, %cst_38 {dimension_numbers = #tpu.dot_dimension_numbers<[1], [0], [0], [1], [0, 0, 1, 1], [], []>} : vector<16x48xf32>, vector<48x16xf32>, vector<16x16xf32> -> vector<16x16xf32>
    %c0_39 = arith.constant 0 : index
    %c0_40 = arith.constant 0 : index
    %32 = vector.load %arg5[%c0_39, %c0_40] : memref<16x1xf32, #tpu.memory_space<vmem>>, vector<16x1xf32>
    %33 = vector.broadcast %32 : vector<16x1xf32> to vector<16x16xf32>
    %34 = arith.addf %31, %33 : vector<16x16xf32>
    %cst_41 = arith.constant 0.000000e+00 : f32
    %35 = vector.broadcast %cst_41 : f32 to vector<16x16xf32>
    %36 = arith.cmpf oge, %34, %35 : vector<16x16xf32>
    %cst_42 = arith.constant 0.00999999977 : f32
    %37 = vector.broadcast %cst_42 : f32 to vector<16x16xf32>
    %38 = arith.mulf %37, %34 : vector<16x16xf32>
    %39 = arith.select %36, %34, %38 : vector<16x16xi1>, vector<16x16xf32>
    %c0_43 = arith.constant 0 : index
    %c0_44 = arith.constant 0 : index
    %40 = vector.load %arg6[%c0_43, %c0_44] : memref<16x4xf32, #tpu.memory_space<vmem>>, vector<16x4xf32>
    %cst_45 = arith.constant dense<0.000000e+00> : vector<16x16xf32>
    %41 = tpu.matmul %40, %5, %cst_45 {dimension_numbers = #tpu.dot_dimension_numbers<[1], [0], [0], [1], [0, 0, 1, 1], [], []>} : vector<16x4xf32>, vector<4x16xf32>, vector<16x16xf32> -> vector<16x16xf32>
    %42 = arith.addf %39, %41 : vector<16x16xf32>
    %c0_46 = arith.constant 0 : index
    %c0_47 = arith.constant 0 : index
    %43 = vector.load %arg7[%c0_46, %c0_47] : memref<16x1xf32, #tpu.memory_space<vmem>>, vector<16x1xf32>
    %44 = vector.broadcast %43 : vector<16x1xf32> to vector<16x16xf32>
    %45 = arith.addf %42, %44 : vector<16x16xf32>
    %c0_48 = arith.constant 0 : index
    %c128_49 = arith.constant 128 : index
    %46 = vector.load %arg19[%c0_48, %c128_49] : memref<16x144xf32, #tpu.memory_space<vmem>>, vector<16x16xf32>
    tpu.vector_store %arg19[%c0_48, %c128_49], %45 {strides = array<i32>} : memref<16x144xf32, #tpu.memory_space<vmem>>, vector<16x16xf32>,
    %c0_50 = arith.constant 0 : index
    %c124 = arith.constant 124 : index
    %47 = vector.load %arg19[%c0_50, %c124] : memref<16x144xf32, #tpu.memory_space<vmem>>, vector<16x16xf32>
    %c0_51 = arith.constant 0 : index
    %c0_52 = arith.constant 0 : index
    %48 = vector.load %arg20[%c0_51, %c0_52] : memref<48x16xf32, #tpu.memory_space<vmem>>, vector<16x16xf32>
    tpu.vector_store %arg20[%c0_51, %c0_52], %47 {strides = array<i32>} : memref<48x16xf32, #tpu.memory_space<vmem>>, vector<16x16xf32>,
    %c0_53 = arith.constant 0 : index
    %c126_54 = arith.constant 126 : index
    %49 = vector.load %arg19[%c0_53, %c126_54] : memref<16x144xf32, #tpu.memory_space<vmem>>, vector<16x16xf32>
    %c16_55 = arith.constant 16 : index
    %c0_56 = arith.constant 0 : index
    %50 = vector.load %arg20[%c16_55, %c0_56] : memref<48x16xf32, #tpu.memory_space<vmem>>, vector<16x16xf32>
    tpu.vector_store %arg20[%c16_55, %c0_56], %49 {strides = array<i32>} : memref<48x16xf32, #tpu.memory_space<vmem>>, vector<16x16xf32>,
    %c32_57 = arith.constant 32 : index
    %c0_58 = arith.constant 0 : index
    %51 = vector.load %arg20[%c32_57, %c0_58] : memref<48x16xf32, #tpu.memory_space<vmem>>, vector<16x16xf32>
    tpu.vector_store %arg20[%c32_57, %c0_58], %45 {strides = array<i32>} : memref<48x16xf32, #tpu.memory_space<vmem>>, vector<16x16xf32>,
    %c0_59 = arith.constant 0 : index
    %c0_60 = arith.constant 0 : index
    %52 = vector.load %arg8[%c0_59, %c0_60] : memref<16x48xf32, #tpu.memory_space<vmem>>, vector<16x48xf32>
    %c0_61 = arith.constant 0 : index
    %c0_62 = arith.constant 0 : index
    %53 = vector.load %arg20[%c0_61, %c0_62] : memref<48x16xf32, #tpu.memory_space<vmem>>, vector<48x16xf32>
    %cst_63 = arith.constant dense<0.000000e+00> : vector<16x16xf32>
    %54 = tpu.matmul %52, %53, %cst_63 {dimension_numbers = #tpu.dot_dimension_numbers<[1], [0], [0], [1], [0, 0, 1, 1], [], []>} : vector<16x48xf32>, vector<48x16xf32>, vector<16x16xf32> -> vector<16x16xf32>
    %c0_64 = arith.constant 0 : index
    %c0_65 = arith.constant 0 : index
    %55 = vector.load %arg9[%c0_64, %c0_65] : memref<16x1xf32, #tpu.memory_space<vmem>>, vector<16x1xf32>
    %56 = vector.broadcast %55 : vector<16x1xf32> to vector<16x16xf32>
    %57 = arith.addf %54, %56 : vector<16x16xf32>
    %cst_66 = arith.constant 0.000000e+00 : f32
    %58 = vector.broadcast %cst_66 : f32 to vector<16x16xf32>
    %59 = arith.cmpf oge, %57, %58 : vector<16x16xf32>
    %cst_67 = arith.constant 0.00999999977 : f32
    %60 = vector.broadcast %cst_67 : f32 to vector<16x16xf32>
    %61 = arith.mulf %60, %57 : vector<16x16xf32>
    %62 = arith.select %59, %57, %61 : vector<16x16xi1>, vector<16x16xf32>
    %c0_68 = arith.constant 0 : index
    %c128_69 = arith.constant 128 : index
    %63 = vector.load %arg19[%c0_68, %c128_69] : memref<16x144xf32, #tpu.memory_space<vmem>>, vector<16x16xf32>
    tpu.vector_store %arg19[%c0_68, %c128_69], %62 {strides = array<i32>} : memref<16x144xf32, #tpu.memory_space<vmem>>, vector<16x16xf32>,
    %c0_70 = arith.constant 0 : index
    %c124_71 = arith.constant 124 : index
    %64 = vector.load %arg19[%c0_70, %c124_71] : memref<16x144xf32, #tpu.memory_space<vmem>>, vector<16x16xf32>
    %c0_72 = arith.constant 0 : index
    %c0_73 = arith.constant 0 : index
    %65 = vector.load %arg20[%c0_72, %c0_73] : memref<48x16xf32, #tpu.memory_space<vmem>>, vector<16x16xf32>
    tpu.vector_store %arg20[%c0_72, %c0_73], %64 {strides = array<i32>} : memref<48x16xf32, #tpu.memory_space<vmem>>, vector<16x16xf32>,
    %c0_74 = arith.constant 0 : index
    %c126_75 = arith.constant 126 : index
    %66 = vector.load %arg19[%c0_74, %c126_75] : memref<16x144xf32, #tpu.memory_space<vmem>>, vector<16x16xf32>
    %c16_76 = arith.constant 16 : index
    %c0_77 = arith.constant 0 : index
    %67 = vector.load %arg20[%c16_76, %c0_77] : memref<48x16xf32, #tpu.memory_space<vmem>>, vector<16x16xf32>
    tpu.vector_store %arg20[%c16_76, %c0_77], %66 {strides = array<i32>} : memref<48x16xf32, #tpu.memory_space<vmem>>, vector<16x16xf32>,
    %c32_78 = arith.constant 32 : index
    %c0_79 = arith.constant 0 : index
    %68 = vector.load %arg20[%c32_78, %c0_79] : memref<48x16xf32, #tpu.memory_space<vmem>>, vector<16x16xf32>
    tpu.vector_store %arg20[%c32_78, %c0_79], %62 {strides = array<i32>} : memref<48x16xf32, #tpu.memory_space<vmem>>, vector<16x16xf32>,
    %c0_80 = arith.constant 0 : index
    %c0_81 = arith.constant 0 : index
    %69 = vector.load %arg10[%c0_80, %c0_81] : memref<16x48xf32, #tpu.memory_space<vmem>>, vector<16x48xf32>
    %c0_82 = arith.constant 0 : index
    %c0_83 = arith.constant 0 : index
    %70 = vector.load %arg20[%c0_82, %c0_83] : memref<48x16xf32, #tpu.memory_space<vmem>>, vector<48x16xf32>
    %cst_84 = arith.constant dense<0.000000e+00> : vector<16x16xf32>
    %71 = tpu.matmul %69, %70, %cst_84 {dimension_numbers = #tpu.dot_dimension_numbers<[1], [0], [0], [1], [0, 0, 1, 1], [], []>} : vector<16x48xf32>, vector<48x16xf32>, vector<16x16xf32> -> vector<16x16xf32>
    %c0_85 = arith.constant 0 : index
    %c0_86 = arith.constant 0 : index
    %72 = vector.load %arg11[%c0_85, %c0_86] : memref<16x1xf32, #tpu.memory_space<vmem>>, vector<16x1xf32>
    %73 = vector.broadcast %72 : vector<16x1xf32> to vector<16x16xf32>
    %74 = arith.addf %71, %73 : vector<16x16xf32>
    %cst_87 = arith.constant 0.000000e+00 : f32
    %75 = vector.broadcast %cst_87 : f32 to vector<16x16xf32>
    %76 = arith.cmpf oge, %74, %75 : vector<16x16xf32>
    %cst_88 = arith.constant 0.00999999977 : f32
    %77 = vector.broadcast %cst_88 : f32 to vector<16x16xf32>
    %78 = arith.mulf %77, %74 : vector<16x16xf32>
    %79 = arith.select %76, %74, %78 : vector<16x16xi1>, vector<16x16xf32>
    %80 = arith.addf %79, %45 : vector<16x16xf32>
    %c0_89 = arith.constant 0 : index
    %c128_90 = arith.constant 128 : index
    %81 = vector.load %arg19[%c0_89, %c128_90] : memref<16x144xf32, #tpu.memory_space<vmem>>, vector<16x16xf32>
    tpu.vector_store %arg19[%c0_89, %c128_90], %80 {strides = array<i32>} : memref<16x144xf32, #tpu.memory_space<vmem>>, vector<16x16xf32>,
    %c0_91 = arith.constant 0 : index
    %c120 = arith.constant 120 : index
    %82 = vector.load %arg19[%c0_91, %c120] : memref<16x144xf32, #tpu.memory_space<vmem>>, vector<16x16xf32>
    %c0_92 = arith.constant 0 : index
    %c0_93 = arith.constant 0 : index
    %83 = vector.load %arg20[%c0_92, %c0_93] : memref<48x16xf32, #tpu.memory_space<vmem>>, vector<16x16xf32>
    tpu.vector_store %arg20[%c0_92, %c0_93], %82 {strides = array<i32>} : memref<48x16xf32, #tpu.memory_space<vmem>>, vector<16x16xf32>,
    %c0_94 = arith.constant 0 : index
    %c124_95 = arith.constant 124 : index
    %84 = vector.load %arg19[%c0_94, %c124_95] : memref<16x144xf32, #tpu.memory_space<vmem>>, vector<16x16xf32>
    %c16_96 = arith.constant 16 : index
    %c0_97 = arith.constant 0 : index
    %85 = vector.load %arg20[%c16_96, %c0_97] : memref<48x16xf32, #tpu.memory_space<vmem>>, vector<16x16xf32>
    tpu.vector_store %arg20[%c16_96, %c0_97], %84 {strides = array<i32>} : memref<48x16xf32, #tpu.memory_space<vmem>>, vector<16x16xf32>,
    %c32_98 = arith.constant 32 : index
    %c0_99 = arith.constant 0 : index
    %86 = vector.load %arg20[%c32_98, %c0_99] : memref<48x16xf32, #tpu.memory_space<vmem>>, vector<16x16xf32>
    tpu.vector_store %arg20[%c32_98, %c0_99], %80 {strides = array<i32>} : memref<48x16xf32, #tpu.memory_space<vmem>>, vector<16x16xf32>,
    %c0_100 = arith.constant 0 : index
    %c0_101 = arith.constant 0 : index
    %87 = vector.load %arg12[%c0_100, %c0_101] : memref<8x48xf32, #tpu.memory_space<vmem>>, vector<8x48xf32>
    %c0_102 = arith.constant 0 : index
    %c0_103 = arith.constant 0 : index
    %88 = vector.load %arg20[%c0_102, %c0_103] : memref<48x16xf32, #tpu.memory_space<vmem>>, vector<48x16xf32>
    %cst_104 = arith.constant dense<0.000000e+00> : vector<8x16xf32>
    %89 = tpu.matmul %87, %88, %cst_104 {dimension_numbers = #tpu.dot_dimension_numbers<[1], [0], [0], [1], [0, 0, 1, 1], [], []>} : vector<8x48xf32>, vector<48x16xf32>, vector<8x16xf32> -> vector<8x16xf32>
    %c0_105 = arith.constant 0 : index
    %c0_106 = arith.constant 0 : index
    %90 = vector.load %arg13[%c0_105, %c0_106] : memref<8x1xf32, #tpu.memory_space<vmem>>, vector<8x1xf32>
    %91 = vector.broadcast %90 : vector<8x1xf32> to vector<8x16xf32>
    %92 = arith.addf %89, %91 : vector<8x16xf32>
    %cst_107 = arith.constant 0.000000e+00 : f32
    %93 = vector.broadcast %cst_107 : f32 to vector<8x16xf32>
    %94 = arith.cmpf oge, %92, %93 : vector<8x16xf32>
    %cst_108 = arith.constant 0.00999999977 : f32
    %95 = vector.broadcast %cst_108 : f32 to vector<8x16xf32>
    %96 = arith.mulf %95, %92 : vector<8x16xf32>
    %97 = arith.select %94, %92, %96 : vector<8x16xi1>, vector<8x16xf32>
    %c0_109 = arith.constant 0 : index
    %c128_110 = arith.constant 128 : index
    %98 = vector.load %arg19[%c0_109, %c128_110] : memref<16x144xf32, #tpu.memory_space<vmem>>, vector<8x16xf32>
    tpu.vector_store %arg19[%c0_109, %c128_110], %97 {strides = array<i32>} : memref<16x144xf32, #tpu.memory_space<vmem>>, vector<8x16xf32>,
    %c0_111 = arith.constant 0 : index
    %c120_112 = arith.constant 120 : index
    %99 = vector.load %arg19[%c0_111, %c120_112] : memref<16x144xf32, #tpu.memory_space<vmem>>, vector<8x16xf32>
    %c0_113 = arith.constant 0 : index
    %c0_114 = arith.constant 0 : index
    %100 = vector.load %arg20[%c0_113, %c0_114] : memref<48x16xf32, #tpu.memory_space<vmem>>, vector<8x16xf32>
    tpu.vector_store %arg20[%c0_113, %c0_114], %99 {strides = array<i32>} : memref<48x16xf32, #tpu.memory_space<vmem>>, vector<8x16xf32>,
    %c0_115 = arith.constant 0 : index
    %c124_116 = arith.constant 124 : index
    %101 = vector.load %arg19[%c0_115, %c124_116] : memref<16x144xf32, #tpu.memory_space<vmem>>, vector<8x16xf32>
    %c8_117 = arith.constant 8 : index
    %c0_118 = arith.constant 0 : index
    %102 = vector.load %arg20[%c8_117, %c0_118] : memref<48x16xf32, #tpu.memory_space<vmem>>, vector<8x16xf32>
    tpu.vector_store %arg20[%c8_117, %c0_118], %101 {strides = array<i32>} : memref<48x16xf32, #tpu.memory_space<vmem>>, vector<8x16xf32>,
    %c16_119 = arith.constant 16 : index
    %c0_120 = arith.constant 0 : index
    %103 = vector.load %arg20[%c16_119, %c0_120] : memref<48x16xf32, #tpu.memory_space<vmem>>, vector<8x16xf32>
    tpu.vector_store %arg20[%c16_119, %c0_120], %97 {strides = array<i32>} : memref<48x16xf32, #tpu.memory_space<vmem>>, vector<8x16xf32>,
    %c0_121 = arith.constant 0 : index
    %c0_122 = arith.constant 0 : index
    %104 = vector.load %arg14[%c0_121, %c0_122] : memref<8x24xf32, #tpu.memory_space<vmem>>, vector<8x24xf32>
    %c0_123 = arith.constant 0 : index
    %c0_124 = arith.constant 0 : index
    %105 = vector.load %arg20[%c0_123, %c0_124] : memref<48x16xf32, #tpu.memory_space<vmem>>, vector<24x16xf32>
    %cst_125 = arith.constant dense<0.000000e+00> : vector<8x16xf32>
    %106 = tpu.matmul %104, %105, %cst_125 {dimension_numbers = #tpu.dot_dimension_numbers<[1], [0], [0], [1], [0, 0, 1, 1], [], []>} : vector<8x24xf32>, vector<24x16xf32>, vector<8x16xf32> -> vector<8x16xf32>
    %c0_126 = arith.constant 0 : index
    %c0_127 = arith.constant 0 : index
    %107 = vector.load %arg15[%c0_126, %c0_127] : memref<8x1xf32, #tpu.memory_space<vmem>>, vector<8x1xf32>
    %108 = vector.broadcast %107 : vector<8x1xf32> to vector<8x16xf32>
    %109 = arith.addf %106, %108 : vector<8x16xf32>
    %cst_128 = arith.constant 0.000000e+00 : f32
    %110 = vector.broadcast %cst_128 : f32 to vector<8x16xf32>
    %111 = arith.cmpf oge, %109, %110 : vector<8x16xf32>
    %cst_129 = arith.constant 0.00999999977 : f32
    %112 = vector.broadcast %cst_129 : f32 to vector<8x16xf32>
    %113 = arith.mulf %112, %109 : vector<8x16xf32>
    %114 = arith.select %111, %109, %113 : vector<8x16xi1>, vector<8x16xf32>
    %c0_130 = arith.constant 0 : index
    %c0_131 = arith.constant 0 : index
    %115 = vector.load %arg16[%c0_130, %c0_131] : memref<8x16xf32, #tpu.memory_space<vmem>>, vector<8x16xf32>
    %cst_132 = arith.constant dense<0.000000e+00> : vector<8x16xf32>
    %116 = tpu.matmul %115, %80, %cst_132 {dimension_numbers = #tpu.dot_dimension_numbers<[1], [0], [0], [1], [0, 0, 1, 1], [], []>} : vector<8x16xf32>, vector<16x16xf32>, vector<8x16xf32> -> vector<8x16xf32>
    %117 = arith.addf %114, %116 : vector<8x16xf32>
    %c0_133 = arith.constant 0 : index
    %c0_134 = arith.constant 0 : index
    %118 = vector.load %arg17[%c0_133, %c0_134] : memref<8x1xf32, #tpu.memory_space<vmem>>, vector<8x1xf32>
    %119 = vector.broadcast %118 : vector<8x1xf32> to vector<8x16xf32>
    %120 = arith.addf %117, %119 : vector<8x16xf32>
    %c0_135 = arith.constant 0 : index
    %c0_136 = arith.constant 0 : index
    %c0_137 = arith.constant 0 : index
    %121 = vector.load %arg18[%c0_135, %c0_136, %c0_137] : memref<1x8x16xf32, #tpu.memory_space<vmem>>, vector<1x8x16xf32>
    %122 = vector.shape_cast %121 : vector<1x8x16xf32> to vector<8x16xf32>
    %123 = vector.shape_cast %120 : vector<8x16xf32> to vector<1x8x16xf32>
    tpu.vector_store %arg18[%c0_135, %c0_136, %c0_137], %123 {strides = array<i32>} : memref<1x8x16xf32, #tpu.memory_space<vmem>>, vector<1x8x16xf32>,
    return
  }
  func.func @transform_0(%arg0: i32) -> (i32, i32, i32) {
    %c0_i32 = arith.constant 0 : i32
    %c0_i32_0 = arith.constant 0 : i32
    %c0_i32_1 = arith.constant 0 : i32
    return %arg0, %c0_i32, %c0_i32_0 : i32, i32, i32
  }
  func.func @transform_1(%arg0: i32) -> (i32, i32) {
    %c0_i32 = arith.constant 0 : i32
    %c0_i32_0 = arith.constant 0 : i32
    %c0_i32_1 = arith.constant 0 : i32
    return %c0_i32, %c0_i32_0 : i32, i32
  }
  func.func @transform_2(%arg0: i32) -> (i32, i32) {
    %c0_i32 = arith.constant 0 : i32
    %c0_i32_0 = arith.constant 0 : i32
    %c0_i32_1 = arith.constant 0 : i32
    return %c0_i32, %c0_i32_0 : i32, i32
  }
  func.func @transform_3(%arg0: i32) -> (i32, i32) {
    %c0_i32 = arith.constant 0 : i32
    %c0_i32_0 = arith.constant 0 : i32
    %c0_i32_1 = arith.constant 0 : i32
    return %c0_i32, %c0_i32_0 : i32, i32
  }
  func.func @transform_4(%arg0: i32) -> (i32, i32) {
    %c0_i32 = arith.constant 0 : i32
    %c0_i32_0 = arith.constant 0 : i32
    %c0_i32_1 = arith.constant 0 : i32
    return %c0_i32, %c0_i32_0 : i32, i32
  }
  func.func @transform_5(%arg0: i32) -> (i32, i32) {
    %c0_i32 = arith.constant 0 : i32
    %c0_i32_0 = arith.constant 0 : i32
    %c0_i32_1 = arith.constant 0 : i32
    return %c0_i32, %c0_i32_0 : i32, i32
  }
  func.func @transform_6(%arg0: i32) -> (i32, i32) {
    %c0_i32 = arith.constant 0 : i32
    %c0_i32_0 = arith.constant 0 : i32
    %c0_i32_1 = arith.constant 0 : i32
    return %c0_i32, %c0_i32_0 : i32, i32
  }
  func.func @transform_7(%arg0: i32) -> (i32, i32) {
    %c0_i32 = arith.constant 0 : i32
    %c0_i32_0 = arith.constant 0 : i32
    %c0_i32_1 = arith.constant 0 : i32
    return %c0_i32, %c0_i32_0 : i32, i32
  }
  func.func @transform_8(%arg0: i32) -> (i32, i32) {
    %c0_i32 = arith.constant 0 : i32
    %c0_i32_0 = arith.constant 0 : i32
    %c0_i32_1 = arith.constant 0 : i32
    return %c0_i32, %c0_i32_0 : i32, i32
  }
  func.func @transform_9(%arg0: i32) -> (i32, i32) {
    %c0_i32 = arith.constant 0 : i32
    %c0_i32_0 = arith.constant 0 : i32
    %c0_i32_1 = arith.constant 0 : i32
    return %c0_i32, %c0_i32_0 : i32, i32
  }
  func.func @transform_10(%arg0: i32) -> (i32, i32) {
    %c0_i32 = arith.constant 0 : i32
    %c0_i32_0 = arith.constant 0 : i32
    %c0_i32_1 = arith.constant 0 : i32
    return %c0_i32, %c0_i32_0 : i32, i32
  }
  func.func @transform_11(%arg0: i32) -> (i32, i32) {
    %c0_i32 = arith.constant 0 : i32
    %c0_i32_0 = arith.constant 0 : i32
    %c0_i32_1 = arith.constant 0 : i32
    return %c0_i32, %c0_i32_0 : i32, i32
  }
  func.func @transform_12(%arg0: i32) -> (i32, i32) {
    %c0_i32 = arith.constant 0 : i32
    %c0_i32_0 = arith.constant 0 : i32
    %c0_i32_1 = arith.constant 0 : i32
    return %c0_i32, %c0_i32_0 : i32, i32
  }
  func.func @transform_13(%arg0: i32) -> (i32, i32) {
    %c0_i32 = arith.constant 0 : i32
    %c0_i32_0 = arith.constant 0 : i32
    %c0_i32_1 = arith.constant 0 : i32
    return %c0_i32, %c0_i32_0 : i32, i32
  }
  func.func @transform_14(%arg0: i32) -> (i32, i32) {
    %c0_i32 = arith.constant 0 : i32
    %c0_i32_0 = arith.constant 0 : i32
    %c0_i32_1 = arith.constant 0 : i32
    return %c0_i32, %c0_i32_0 : i32, i32
  }
  func.func @transform_15(%arg0: i32) -> (i32, i32) {
    %c0_i32 = arith.constant 0 : i32
    %c0_i32_0 = arith.constant 0 : i32
    %c0_i32_1 = arith.constant 0 : i32
    return %c0_i32, %c0_i32_0 : i32, i32
  }
  func.func @transform_16(%arg0: i32) -> (i32, i32) {
    %c0_i32 = arith.constant 0 : i32
    %c0_i32_0 = arith.constant 0 : i32
    %c0_i32_1 = arith.constant 0 : i32
    return %c0_i32, %c0_i32_0 : i32, i32
  }
  func.func @transform_17(%arg0: i32) -> (i32, i32, i32) {
    %c0_i32 = arith.constant 0 : i32
    %c0_i32_0 = arith.constant 0 : i32
    %c0_i32_1 = arith.constant 0 : i32
    return %arg0, %c0_i32, %c0_i32_0 : i32, i32, i32
  }
}

</mosaic_0001>

<llo_original>
// kernel: tpu_custom_call.1
$region0: #{tpu_custom_call.1}
  #allocation0 [shape = 'u32[]', space=smem, size = 0x4, offset = 0x4, fixed_abs, tag = 'smem constant byte address 0x4 - core index']
  #allocation1 [shape = 'u32[72,128]{1,0:T(1,128)}', space=vmem, size = 0x9000, scoped, tag = 'internal scratch']
  #allocation2 [shape = 'f32[16,144]{1,0:T(8,128)}', space=vmem, size = 0x4000, scoped, tag = 'scratch operand']
  #allocation3 [shape = 'f32[48,16]{1,0:T(8,128)}', space=vmem, size = 0x6000, scoped, tag = 'scratch operand']
  %s0 = inlined_call_operand.vmem [shape: f32[2,4,16], index: 0, kind: input, shape index: {}]
  %s1 = inlined_call_operand.vmem [shape: f32[16,24], index: 1, kind: input, shape index: {}]
  %s2 = inlined_call_operand.vmem [shape: f32[16,1], index: 2, kind: input, shape index: {}]
  %s3 = inlined_call_operand.vmem [shape: f32[16,48], index: 3, kind: input, shape index: {}]
  %s4 = inlined_call_operand.vmem [shape: f32[16,1], index: 4, kind: input, shape index: {}]
  %s5 = inlined_call_operand.vmem [shape: f32[16,4], index: 5, kind: input, shape index: {}]
  %s6 = inlined_call_operand.vmem [shape: f32[16,1], index: 6, kind: input, shape index: {}]
  %s7 = inlined_call_operand.vmem [shape: f32[16,48], index: 7, kind: input, shape index: {}]
  %s8 = inlined_call_operand.vmem [shape: f32[16,1], index: 8, kind: input, shape index: {}]
  %s9 = inlined_call_operand.vmem [shape: f32[16,48], index: 9, kind: input, shape index: {}]
  %s10 = inlined_call_operand.vmem [shape: f32[16,1], index: 10, kind: input, shape index: {}]
  %s11 = inlined_call_operand.vmem [shape: f32[8,48], index: 11, kind: input, shape index: {}]
  %s12 = inlined_call_operand.vmem [shape: f32[8,1], index: 12, kind: input, shape index: {}]
  %s13 = inlined_call_operand.vmem [shape: f32[8,24], index: 13, kind: input, shape index: {}]
  %s14 = inlined_call_operand.vmem [shape: f32[8,1], index: 14, kind: input, shape index: {}]
  %s15 = inlined_call_operand.vmem [shape: f32[8,16], index: 15, kind: input, shape index: {}]
  %s16 = inlined_call_operand.vmem [shape: f32[8,1], index: 16, kind: input, shape index: {}]
  %s17 = inlined_call_operand.hbm [shape: f32[2,8,16], index: 17, kind: output, shape index: {}]
  %s18 = sld [smem:[#allocation0]]
  $region101: #{tpu_custom_call.1} parent=0
    _
  %s20 = ssub.s32 1, %s18
  %s21 = scalar_select 0, %s20, %s18
  $region1: #{tpu_custom_call.1} parent=0
    #allocation4 [shape = 'u8[8192]{0}', space=vmem, size = 0x2000, scoped, tag = 'output window, operand 0']
    #allocation5 [shape = 's32[2]{0}', space=sflag, size = 0x8, scoped, tag = 'scoped memory for tpu_custom_call.1']
    %22 = vsyncpa [#allocation5], 0
    %s23 = scalar_lea.sflag [#allocation5], 1
    %24 = vsyncpa %s23, 0
    loop: start=0, step=1, limit=4
    $region2: #{tpu_custom_call.1} parent=1 // loop_pre_header
      _
    $region3: #{tpu_custom_call.1} parent=1 // loop_header
      %s26 = sphi 0, %s30
      %p27 = scmp.ge.s32.totalorder %s26, 4
      %s36 = sphi 0, %s38
      %s39 = sphi 0, %s36
      %s40 = sphi 0, %s39
      %s56 = sphi 0, %s40
      %s60 = sphi 0, %s60
      %s62 = sphi 0, %s60
      %s63 = sphi 0, %s62
      %s77 = sphi 0, %s63
      %s81 = sphi 0, %s81
      %s83 = sphi 0, %s81
      %s84 = sphi 0, %s83
      %s98 = sphi 0, %s84
      %s102 = sphi 0, %s102
      %s104 = sphi 0, %s102
      %s105 = sphi 0, %s104
      %s119 = sphi 0, %s105
      %s123 = sphi 0, %s123
      %s125 = sphi 0, %s123
      %s126 = sphi 0, %s125
      %s140 = sphi 0, %s126
      %s144 = sphi 0, %s144
      %s146 = sphi 0, %s144
      %s147 = sphi 0, %s146
      %s161 = sphi 0, %s147
      %s165 = sphi 0, %s165
      %s167 = sphi 0, %s165
      %s168 = sphi 0, %s167
      %s182 = sphi 0, %s168
      %s186 = sphi 0, %s186
      %s188 = sphi 0, %s186
      %s189 = sphi 0, %s188
      %s203 = sphi 0, %s189
      %s207 = sphi 0, %s207
      %s209 = sphi 0, %s207
      %s210 = sphi 0, %s209
      %s224 = sphi 0, %s210
      %s228 = sphi 0, %s228
      %s230 = sphi 0, %s228
      %s231 = sphi 0, %s230
      %s245 = sphi 0, %s231
      %s249 = sphi 0, %s249
      %s251 = sphi 0, %s249
      %s252 = sphi 0, %s251
      %s266 = sphi 0, %s252
      %s270 = sphi 0, %s270
      %s272 = sphi 0, %s270
      %s273 = sphi 0, %s272
      %s287 = sphi 0, %s273
      %s291 = sphi 0, %s291
      %s293 = sphi 0, %s291
      %s294 = sphi 0, %s293
      %s308 = sphi 0, %s294
      %s312 = sphi 0, %s312
      %s314 = sphi 0, %s312
      %s315 = sphi 0, %s314
      %s329 = sphi 0, %s315
      %s333 = sphi 0, %s333
      %s335 = sphi 0, %s333
      %s336 = sphi 0, %s335
      %s350 = sphi 0, %s336
      %s354 = sphi 0, %s354
      %s356 = sphi 0, %s354
      %s357 = sphi 0, %s356
      %s371 = sphi 0, %s357
      %s375 = sphi 0, %s375
      %s377 = sphi 0, %s375
      %s378 = sphi 0, %s377
      %s392 = sphi 0, %s378
      %s398 = sphi 0, %s400
      %s401 = sphi 0, %s398
      %s402 = sphi 0, %s401
      %s418 = sphi 0, %s402
    $region4: #{tpu_custom_call.1} parent=1 // loop_header_branch
      %29 = sbr.rel (%p27) target = $region8
    $region5: #{tpu_custom_call.1} parent=1 // loop_body
      %s31 = ssub.s32 %s26, 1
      %s32 = ssub.s32 %s26, 2
      %s33 = sadd.s32 %s26, 1
      %s34 = ssub.s32 %s26, %s33
      %p35 = scmp.eq.s32.totalorder %s34, 0
      %s37 = sadd.s32 %s36, 1
      %s38 = scalar_select %p35, %s36, %s37
      %p41 = pneg %p35
      %p42 = scmp.eq.s32.totalorder %s26, 1
      %p43 = por %p41, %p42
      %p44 = scmp.ne.s32.totalorder %s36, %s39
      %p45 = scmp.eq.s32.totalorder %s26, 0
      %p46 = por %p44, %p45
      %p47 = scmp.ne.s32.totalorder %s36, %s39
      %p48 = scmp.eq.s32.totalorder %s31, 1
      %p49 = por %p47, %p48
      %p50 = scmp.ne.s32.totalorder %s39, %s40
      %p51 = scmp.eq.s32.totalorder %s31, 0
      %p52 = por %p50, %p51
      %p53 = scmp.ne.s32.totalorder %s39, %s40
      %p54 = scmp.eq.s32.totalorder %s32, 1
      %p55 = por %p53, %p54
      %p57 = scmp.ne.s32.totalorder %s40, %s56
      %p58 = scmp.eq.s32.totalorder %s32, 0
      %p59 = por %p57, %p58
      %s61 = sadd.s32 %s60, 1
      %p64 = scmp.eq.s32.totalorder %s26, 1
      %p65 = scmp.ne.s32.totalorder %s60, %s62
      %p66 = scmp.eq.s32.totalorder %s26, 0
      %p67 = por %p65, %p66
      %p68 = scmp.ne.s32.totalorder %s60, %s62
      %p69 = scmp.eq.s32.totalorder %s31, 1
      %p70 = por %p68, %p69
      %p71 = scmp.ne.s32.totalorder %s62, %s63
      %p72 = scmp.eq.s32.totalorder %s31, 0
      %p73 = por %p71, %p72
      %p74 = scmp.ne.s32.totalorder %s62, %s63
      %p75 = scmp.eq.s32.totalorder %s32, 1
      %p76 = por %p74, %p75
      %p78 = scmp.ne.s32.totalorder %s63, %s77
      %p79 = scmp.eq.s32.totalorder %s32, 0
      %p80 = por %p78, %p79
      %s82 = sadd.s32 %s81, 1
      %p85 = scmp.eq.s32.totalorder %s26, 1
      %p86 = scmp.ne.s32.totalorder %s81, %s83
      %p87 = scmp.eq.s32.totalorder %s26, 0
      %p88 = por %p86, %p87
      %p89 = scmp.ne.s32.totalorder %s81, %s83
      %p90 = scmp.eq.s32.totalorder %s31, 1
      %p91 = por %p89, %p90
      %p92 = scmp.ne.s32.totalorder %s83, %s84
      %p93 = scmp.eq.s32.totalorder %s31, 0
      %p94 = por %p92, %p93
      %p95 = scmp.ne.s32.totalorder %s83, %s84
      %p96 = scmp.eq.s32.totalorder %s32, 1
      %p97 = por %p95, %p96
      %p99 = scmp.ne.s32.totalorder %s84, %s98
      %p100 = scmp.eq.s32.totalorder %s32, 0
      %p101 = por %p99, %p100
      %s103 = sadd.s32 %s102, 1
      %p106 = scmp.eq.s32.totalorder %s26, 1
      %p107 = scmp.ne.s32.totalorder %s102, %s104
      %p108 = scmp.eq.s32.totalorder %s26, 0
      %p109 = por %p107, %p108
      %p110 = scmp.ne.s32.totalorder %s102, %s104
      %p111 = scmp.eq.s32.totalorder %s31, 1
      %p112 = por %p110, %p111
      %p113 = scmp.ne.s32.totalorder %s104, %s105
      %p114 = scmp.eq.s32.totalorder %s31, 0
      %p115 = por %p113, %p114
      %p116 = scmp.ne.s32.totalorder %s104, %s105
      %p117 = scmp.eq.s32.totalorder %s32, 1
      %p118 = por %p116, %p117
      %p120 = scmp.ne.s32.totalorder %s105, %s119
      %p121 = scmp.eq.s32.totalorder %s32, 0
      %p122 = por %p120, %p121
      %s124 = sadd.s32 %s123, 1
      %p127 = scmp.eq.s32.totalorder %s26, 1
      %p128 = scmp.ne.s32.totalorder %s123, %s125
      %p129 = scmp.eq.s32.totalorder %s26, 0
      %p130 = por %p128, %p129
      %p131 = scmp.ne.s32.totalorder %s123, %s125
      %p132 = scmp.eq.s32.totalorder %s31, 1
      %p133 = por %p131, %p132
      %p134 = scmp.ne.s32.totalorder %s125, %s126
      %p135 = scmp.eq.s32.totalorder %s31, 0
      %p136 = por %p134, %p135
      %p137 = scmp.ne.s32.totalorder %s125, %s126
      %p138 = scmp.eq.s32.totalorder %s32, 1
      %p139 = por %p137, %p138
      %p141 = scmp.ne.s32.totalorder %s126, %s140
      %p142 = scmp.eq.s32.totalorder %s32, 0
      %p143 = por %p141, %p142
      %s145 = sadd.s32 %s144, 1
      %p148 = scmp.eq.s32.totalorder %s26, 1
      %p149 = scmp.ne.s32.totalorder %s144, %s146
      %p150 = scmp.eq.s32.totalorder %s26, 0
      %p151 = por %p149, %p150
      %p152 = scmp.ne.s32.totalorder %s144, %s146
      %p153 = scmp.eq.s32.totalorder %s31, 1
      %p154 = por %p152, %p153
      %p155 = scmp.ne.s32.totalorder %s146, %s147
      %p156 = scmp.eq.s32.totalorder %s31, 0
      %p157 = por %p155, %p156
      %p158 = scmp.ne.s32.totalorder %s146, %s147
      %p159 = scmp.eq.s32.totalorder %s32, 1
      %p160 = por %p158, %p159
      %p162 = scmp.ne.s32.totalorder %s147, %s161
      %p163 = scmp.eq.s32.totalorder %s32, 0
      %p164 = por %p162, %p163
      %s166 = sadd.s32 %s165, 1
      %p169 = scmp.eq.s32.totalorder %s26, 1
      %p170 = scmp.ne.s32.totalorder %s165, %s167
      %p171 = scmp.eq.s32.totalorder %s26, 0
      %p172 = por %p170, %p171
      %p173 = scmp.ne.s32.totalorder %s165, %s167
      %p174 = scmp.eq.s32.totalorder %s31, 1
      %p175 = por %p173, %p174
      %p176 = scmp.ne.s32.totalorder %s167, %s168
      %p177 = scmp.eq.s32.totalorder %s31, 0
      %p178 = por %p176, %p177
      %p179 = scmp.ne.s32.totalorder %s167, %s168
      %p180 = scmp.eq.s32.totalorder %s32, 1
      %p181 = por %p179, %p180
      %p183 = scmp.ne.s32.totalorder %s168, %s182
      %p184 = scmp.eq.s32.totalorder %s32, 0
      %p185 = por %p183, %p184
      %s187 = sadd.s32 %s186, 1
      %p190 = scmp.eq.s32.totalorder %s26, 1
      %p191 = scmp.ne.s32.totalorder %s186, %s188
      %p192 = scmp.eq.s32.totalorder %s26, 0
      %p193 = por %p191, %p192
      %p194 = scmp.ne.s32.totalorder %s186, %s188
      %p195 = scmp.eq.s32.totalorder %s31, 1
      %p196 = por %p194, %p195
      %p197 = scmp.ne.s32.totalorder %s188, %s189
      %p198 = scmp.eq.s32.totalorder %s31, 0
      %p199 = por %p197, %p198
      %p200 = scmp.ne.s32.totalorder %s188, %s189
      %p201 = scmp.eq.s32.totalorder %s32, 1
      %p202 = por %p200, %p201
      %p204 = scmp.ne.s32.totalorder %s189, %s203
      %p205 = scmp.eq.s32.totalorder %s32, 0
      %p206 = por %p204, %p205
      %s208 = sadd.s32 %s207, 1
      %p211 = scmp.eq.s32.totalorder %s26, 1
      %p212 = scmp.ne.s32.totalorder %s207, %s209
      %p213 = scmp.eq.s32.totalorder %s26, 0
      %p214 = por %p212, %p213
      %p215 = scmp.ne.s32.totalorder %s207, %s209
      %p216 = scmp.eq.s32.totalorder %s31, 1
      %p217 = por %p215, %p216
      %p218 = scmp.ne.s32.totalorder %s209, %s210
      %p219 = scmp.eq.s32.totalorder %s31, 0
      %p220 = por %p218, %p219
      %p221 = scmp.ne.s32.totalorder %s209, %s210
      %p222 = scmp.eq.s32.totalorder %s32, 1
      %p223 = por %p221, %p222
      %p225 = scmp.ne.s32.totalorder %s210, %s224
      %p226 = scmp.eq.s32.totalorder %s32, 0
      %p227 = por %p225, %p226
      %s229 = sadd.s32 %s228, 1
      %p232 = scmp.eq.s32.totalorder %s26, 1
      %p233 = scmp.ne.s32.totalorder %s228, %s230
      %p234 = scmp.eq.s32.totalorder %s26, 0
      %p235 = por %p233, %p234
      %p236 = scmp.ne.s32.totalorder %s228, %s230
      %p237 = scmp.eq.s32.totalorder %s31, 1
      %p238 = por %p236, %p237
      %p239 = scmp.ne.s32.totalorder %s230, %s231
      %p240 = scmp.eq.s32.totalorder %s31, 0
      %p241 = por %p239, %p240
      %p242 = scmp.ne.s32.totalorder %s230, %s231
      %p243 = scmp.eq.s32.totalorder %s32, 1
      %p244 = por %p242, %p243
      %p246 = scmp.ne.s32.totalorder %s231, %s245
      %p247 = scmp.eq.s32.totalorder %s32, 0
      %p248 = por %p246, %p247
      %s250 = sadd.s32 %s249, 1
      %p253 = scmp.eq.s32.totalorder %s26, 1
      %p254 = scmp.ne.s32.totalorder %s249, %s251
      %p255 = scmp.eq.s32.totalorder %s26, 0
      %p256 = por %p254, %p255
      %p257 = scmp.ne.s32.totalorder %s249, %s251
      %p258 = scmp.eq.s32.totalorder %s31, 1
      %p259 = por %p257, %p258
      %p260 = scmp.ne.s32.totalorder %s251, %s252
      %p261 = scmp.eq.s32.totalorder %s31, 0
      %p262 = por %p260, %p261
      %p263 = scmp.ne.s32.totalorder %s251, %s252
      %p264 = scmp.eq.s32.totalorder %s32, 1
      %p265 = por %p263, %p264
      %p267 = scmp.ne.s32.totalorder %s252, %s266
      %p268 = scmp.eq.s32.totalorder %s32, 0
      %p269 = por %p267, %p268
      %s271 = sadd.s32 %s270, 1
      %p274 = scmp.eq.s32.totalorder %s26, 1
      %p275 = scmp.ne.s32.totalorder %s270, %s272
      %p276 = scmp.eq.s32.totalorder %s26, 0
      %p277 = por %p275, %p276
      %p278 = scmp.ne.s32.totalorder %s270, %s272
      %p279 = scmp.eq.s32.totalorder %s31, 1
      %p280 = por %p278, %p279
      %p281 = scmp.ne.s32.totalorder %s272, %s273
      %p282 = scmp.eq.s32.totalorder %s31, 0
      %p283 = por %p281, %p282
      %p284 = scmp.ne.s32.totalorder %s272, %s273
      %p285 = scmp.eq.s32.totalorder %s32, 1
      %p286 = por %p284, %p285
      %p288 = scmp.ne.s32.totalorder %s273, %s287
      %p289 = scmp.eq.s32.totalorder %s32, 0
      %p290 = por %p288, %p289
      %s292 = sadd.s32 %s291, 1
      %p295 = scmp.eq.s32.totalorder %s26, 1
      %p296 = scmp.ne.s32.totalorder %s291, %s293
      %p297 = scmp.eq.s32.totalorder %s26, 0
      %p298 = por %p296, %p297
      %p299 = scmp.ne.s32.totalorder %s291, %s293
      %p300 = scmp.eq.s32.totalorder %s31, 1
      %p301 = por %p299, %p300
      %p302 = scmp.ne.s32.totalorder %s293, %s294
      %p303 = scmp.eq.s32.totalorder %s31, 0
      %p304 = por %p302, %p303
      %p305 = scmp.ne.s32.totalorder %s293, %s294
      %p306 = scmp.eq.s32.totalorder %s32, 1
      %p307 = por %p305, %p306
      %p309 = scmp.ne.s32.totalorder %s294, %s308
      %p310 = scmp.eq.s32.totalorder %s32, 0
      %p311 = por %p309, %p310
      %s313 = sadd.s32 %s312, 1
      %p316 = scmp.eq.s32.totalorder %s26, 1
      %p317 = scmp.ne.s32.totalorder %s312, %s314
      %p318 = scmp.eq.s32.totalorder %s26, 0
      %p319 = por %p317, %p318
      %p320 = scmp.ne.s32.totalorder %s312, %s314
      %p321 = scmp.eq.s32.totalorder %s31, 1
      %p322 = por %p320, %p321
      %p323 = scmp.ne.s32.totalorder %s314, %s315
      %p324 = scmp.eq.s32.totalorder %s31, 0
      %p325 = por %p323, %p324
      %p326 = scmp.ne.s32.totalorder %s314, %s315
      %p327 = scmp.eq.s32.totalorder %s32, 1
      %p328 = por %p326, %p327
      %p330 = scmp.ne.s32.totalorder %s315, %s329
      %p331 = scmp.eq.s32.totalorder %s32, 0
      %p332 = por %p330, %p331
      %s334 = sadd.s32 %s333, 1
      %p337 = scmp.eq.s32.totalorder %s26, 1
      %p338 = scmp.ne.s32.totalorder %s333, %s335
      %p339 = scmp.eq.s32.totalorder %s26, 0
      %p340 = por %p338, %p339
      %p341 = scmp.ne.s32.totalorder %s333, %s335
      %p342 = scmp.eq.s32.totalorder %s31, 1
      %p343 = por %p341, %p342
      %p344 = scmp.ne.s32.totalorder %s335, %s336
      %p345 = scmp.eq.s32.totalorder %s31, 0
      %p346 = por %p344, %p345
      %p347 = scmp.ne.s32.totalorder %s335, %s336
      %p348 = scmp.eq.s32.totalorder %s32, 1
      %p349 = por %p347, %p348
      %p351 = scmp.ne.s32.totalorder %s336, %s350
      %p352 = scmp.eq.s32.totalorder %s32, 0
      %p353 = por %p351, %p352
      %s355 = sadd.s32 %s354, 1
      %p358 = scmp.eq.s32.totalorder %s26, 1
      %p359 = scmp.ne.s32.totalorder %s354, %s356
      %p360 = scmp.eq.s32.totalorder %s26, 0
      %p361 = por %p359, %p360
      %p362 = scmp.ne.s32.totalorder %s354, %s356
      %p363 = scmp.eq.s32.totalorder %s31, 1
      %p364 = por %p362, %p363
      %p365 = scmp.ne.s32.totalorder %s356, %s357
      %p366 = scmp.eq.s32.totalorder %s31, 0
      %p367 = por %p365, %p366
      %p368 = scmp.ne.s32.totalorder %s356, %s357
      %p369 = scmp.eq.s32.totalorder %s32, 1
      %p370 = por %p368, %p369
      %p372 = scmp.ne.s32.totalorder %s357, %s371
      %p373 = scmp.eq.s32.totalorder %s32, 0
      %p374 = por %p372, %p373
      %s376 = sadd.s32 %s375, 1
      %p379 = scmp.eq.s32.totalorder %s26, 1
      %p380 = scmp.ne.s32.totalorder %s375, %s377
      %p381 = scmp.eq.s32.totalorder %s26, 0
      %p382 = por %p380, %p381
      %p383 = scmp.ne.s32.totalorder %s375, %s377
      %p384 = scmp.eq.s32.totalorder %s31, 1
      %p385 = por %p383, %p384
      %p386 = scmp.ne.s32.totalorder %s377, %s378
      %p387 = scmp.eq.s32.totalorder %s31, 0
      %p388 = por %p386, %p387
      %p389 = scmp.ne.s32.totalorder %s377, %s378
      %p390 = scmp.eq.s32.totalorder %s32, 1
      %p391 = por %p389, %p390
      %p393 = scmp.ne.s32.totalorder %s378, %s392
      %p394 = scmp.eq.s32.totalorder %s32, 0
      %p395 = por %p393, %p394
      %s396 = ssub.s32 %s26, %s33
      %p397 = scmp.eq.s32.totalorder %s396, 0
      %s399 = sadd.s32 %s398, 1
      %s400 = scalar_select %p397, %s398, %s399
      %p403 = pneg %p397
      %p404 = scmp.eq.s32.totalorder %s26, 1
      %p405 = por %p403, %p404
      %p406 = scmp.ne.s32.totalorder %s398, %s401
      %p407 = scmp.eq.s32.totalorder %s26, 0
      %p408 = por %p406, %p407
      %p409 = scmp.ne.s32.totalorder %s398, %s401
      %p410 = scmp.eq.s32.totalorder %s31, 1
      %p411 = por %p409, %p410
      %p412 = scmp.ne.s32.totalorder %s401, %s402
      %p413 = scmp.eq.s32.totalorder %s31, 0
      %p414 = por %p412, %p413
      %p415 = scmp.ne.s32.totalorder %s401, %s402
      %p416 = scmp.eq.s32.totalorder %s32, 1
      %p417 = por %p415, %p416
      %p419 = scmp.ne.s32.totalorder %s402, %s418
      %p420 = scmp.eq.s32.totalorder %s32, 0
      %p421 = por %p419, %p420
      %p422 = scmp.le.s32.totalorder 1, %s26
      %p423 = scmp.lt.s32.totalorder %s26, 3
      %p424 = pnand %p422, %p423
      %p425 = pneg %p424
      // Predicated region
      $region9: #{tpu_custom_call.1} parent=5 // pred_check
        _
      $region10: #{tpu_custom_call.1} parent=5 // pred_check_branch
        %427 = sbr.rel (%p424) target = $region12
      $region11: #{tpu_custom_call.1} parent=5 // pred_region
        %s428 = ssub.s32 %s26, 1
        // Predicated region
        $region13: #{tpu_custom_call.1} parent=11 // pred_check
          %p429 = pneg %p73
        $region14: #{tpu_custom_call.1} parent=11 // pred_check_branch
          %431 = sbr.rel (%p429) target = $region16
        $region15: #{tpu_custom_call.1} parent=11 // pred_region
          _
        $region16: #{tpu_custom_call.1} parent=11 // pred_fallthru
          _
        // Predicated region
        $region17: #{tpu_custom_call.1} parent=11 // pred_check
          %p432 = pneg %p94
        $region18: #{tpu_custom_call.1} parent=11 // pred_check_branch
          %434 = sbr.rel (%p432) target = $region20
        $region19: #{tpu_custom_call.1} parent=11 // pred_region
          _
        $region20: #{tpu_custom_call.1} parent=11 // pred_fallthru
          _
        // Predicated region
        $region21: #{tpu_custom_call.1} parent=11 // pred_check
          %p435 = pneg %p115
        $region22: #{tpu_custom_call.1} parent=11 // pred_check_branch
          %437 = sbr.rel (%p435) target = $region24
        $region23: #{tpu_custom_call.1} parent=11 // pred_region
          _
        $region24: #{tpu_custom_call.1} parent=11 // pred_fallthru
          _
        // Predicated region
        $region25: #{tpu_custom_call.1} parent=11 // pred_check
          %p438 = pneg %p136
        $region26: #{tpu_custom_call.1} parent=11 // pred_check_branch
          %440 = sbr.rel (%p438) target = $region28
        $region27: #{tpu_custom_call.1} parent=11 // pred_region
          _
        $region28: #{tpu_custom_call.1} parent=11 // pred_fallthru
          _
        // Predicated region
        $region29: #{tpu_custom_call.1} parent=11 // pred_check
          %p441 = pneg %p157
        $region30: #{tpu_custom_call.1} parent=11 // pred_check_branch
          %443 = sbr.rel (%p441) target = $region32
        $region31: #{tpu_custom_call.1} parent=11 // pred_region
          _
        $region32: #{tpu_custom_call.1} parent=11 // pred_fallthru
          _
        // Predicated region
        $region33: #{tpu_custom_call.1} parent=11 // pred_check
          %p444 = pneg %p178
        $region34: #{tpu_custom_call.1} parent=11 // pred_check_branch
          %446 = sbr.rel (%p444) target = $region36
        $region35: #{tpu_custom_call.1} parent=11 // pred_region
          _
        $region36: #{tpu_custom_call.1} parent=11 // pred_fallthru
          _
        // Predicated region
        $region37: #{tpu_custom_call.1} parent=11 // pred_check
          %p447 = pneg %p199
        $region38: #{tpu_custom_call.1} parent=11 // pred_check_branch
          %449 = sbr.rel (%p447) target = $region40
        $region39: #{tpu_custom_call.1} parent=11 // pred_region
          _
        $region40: #{tpu_custom_call.1} parent=11 // pred_fallthru
          _
        // Predicated region
        $region41: #{tpu_custom_call.1} parent=11 // pred_check
          %p450 = pneg %p220
        $region42: #{tpu_custom_call.1} parent=11 // pred_check_branch
          %452 = sbr.rel (%p450) target = $region44
        $region43: #{tpu_custom_call.1} parent=11 // pred_region
          _
        $region44: #{tpu_custom_call.1} parent=11 // pred_fallthru
          _
        // Predicated region
        $region45: #{tpu_custom_call.1} parent=11 // pred_check
          %p453 = pneg %p241
        $region46: #{tpu_custom_call.1} parent=11 // pred_check_branch
          %455 = sbr.rel (%p453) target = $region48
        $region47: #{tpu_custom_call.1} parent=11 // pred_region
          _
        $region48: #{tpu_custom_call.1} parent=11 // pred_fallthru
          _
        // Predicated region
        $region49: #{tpu_custom_call.1} parent=11 // pred_check
          %p456 = pneg %p262
        $region50: #{tpu_custom_call.1} parent=11 // pred_check_branch
          %458 = sbr.rel (%p456) target = $region52
        $region51: #{tpu_custom_call.1} parent=11 // pred_region
          _
        $region52: #{tpu_custom_call.1} parent=11 // pred_fallthru
          _
        // Predicated region
        $region53: #{tpu_custom_call.1} parent=11 // pred_check
          %p459 = pneg %p283
        $region54: #{tpu_custom_call.1} parent=11 // pred_check_branch
          %461 = sbr.rel (%p459) target = $region56
        $region55: #{tpu_custom_call.1} parent=11 // pred_region
          _
        $region56: #{tpu_custom_call.1} parent=11 // pred_fallthru
          _
        // Predicated region
        $region57: #{tpu_custom_call.1} parent=11 // pred_check
          %p462 = pneg %p304
        $region58: #{tpu_custom_call.1} parent=11 // pred_check_branch
          %464 = sbr.rel (%p462) target = $region60
        $region59: #{tpu_custom_call.1} parent=11 // pred_region
          _
        $region60: #{tpu_custom_call.1} parent=11 // pred_fallthru
          _
        // Predicated region
        $region61: #{tpu_custom_call.1} parent=11 // pred_check
          %p465 = pneg %p325
        $region62: #{tpu_custom_call.1} parent=11 // pred_check_branch
          %467 = sbr.rel (%p465) target = $region64
        $region63: #{tpu_custom_call.1} parent=11 // pred_region
          _
        $region64: #{tpu_custom_call.1} parent=11 // pred_fallthru
          _
        // Predicated region
        $region65: #{tpu_custom_call.1} parent=11 // pred_check
          %p468 = pneg %p346
        $region66: #{tpu_custom_call.1} parent=11 // pred_check_branch
          %470 = sbr.rel (%p468) target = $region68
        $region67: #{tpu_custom_call.1} parent=11 // pred_region
          _
        $region68: #{tpu_custom_call.1} parent=11 // pred_fallthru
          _
        // Predicated region
        $region69: #{tpu_custom_call.1} parent=11 // pred_check
          %p471 = pneg %p367
        $region70: #{tpu_custom_call.1} parent=11 // pred_check_branch
          %473 = sbr.rel (%p471) target = $region72
        $region71: #{tpu_custom_call.1} parent=11 // pred_region
          _
        $region72: #{tpu_custom_call.1} parent=11 // pred_fallthru
          _
        // Predicated region
        $region73: #{tpu_custom_call.1} parent=11 // pred_check
          %p474 = pneg %p388
        $region74: #{tpu_custom_call.1} parent=11 // pred_check_branch
          %476 = sbr.rel (%p474) target = $region76
        $region75: #{tpu_custom_call.1} parent=11 // pred_region
          _
        $region76: #{tpu_custom_call.1} parent=11 // pred_fallthru
          _
      $region12: #{tpu_custom_call.1} parent=5 // pred_fallthru
        _
      %p477 = scmp.lt.s32.totalorder %s26, 2
      // Predicated region
      $region77: #{tpu_custom_call.1} parent=5 // pred_check
        %p478 = pneg %p477
      $region78: #{tpu_custom_call.1} parent=5 // pred_check_branch
        %480 = sbr.rel (%p478) target = $region80
      $region79: #{tpu_custom_call.1} parent=5 // pred_region
        // Predicated region
        $region81: #{tpu_custom_call.1} parent=79 // pred_check
          %p481 = pneg %p46
        $region82: #{tpu_custom_call.1} parent=79 // pred_check_branch
          %483 = sbr.rel (%p481) target = $region84
        $region83: #{tpu_custom_call.1} parent=79 // pred_region
          %p484 = scmp.lt.s32.totalorder %s26, 1
          %s485 = scalar_select %p484, %s26, 1
          %s486 = smul.addr %s485, 4
          %s487 = scalar_lea.vmem %s0, %s486
        $region84: #{tpu_custom_call.1} parent=79 // pred_fallthru
          _
      $region80: #{tpu_custom_call.1} parent=5 // pred_fallthru
        _
      %p488 = scmp.le.s32.totalorder 1, %s26
      %p489 = scmp.lt.s32.totalorder %s26, 3
      %p490 = pnand %p488, %p489
      %p491 = pneg %p490
      // Predicated region
      $region85: #{tpu_custom_call.1} parent=5 // pred_check
        _
      $region86: #{tpu_custom_call.1} parent=5 // pred_check_branch
        %493 = sbr.rel (%p490) target = $region88
      $region87: #{tpu_custom_call.1} parent=5 // pred_region
        %s494 = ssub.s32 %s26, 1
        %p495 = scmp.lt.s32.totalorder %s31, 1
        %s496 = scalar_select %p495, %s31, 1
        %s497 = smul.addr %s496, 4
        %s498 = scalar_lea.vmem %s0, %s497
        %p499 = pneg %p52
        %p500 = pneg %p49
        %p501 = pneg %p73
        %p502 = pneg %p70
        %p503 = pneg %p94
        %p504 = pneg %p91
        %p505 = pneg %p115
        %p506 = pneg %p112
        %p507 = pneg %p136
        %p508 = pneg %p133
        %p509 = pneg %p157
        %p510 = pneg %p154
        %p511 = pneg %p178
        %p512 = pneg %p175
        %p513 = pneg %p199
        %p514 = pneg %p196
        %p515 = pneg %p220
        %p516 = pneg %p217
        %p517 = pneg %p241
        %p518 = pneg %p238
        %p519 = pneg %p262
        %p520 = pneg %p259
        %p521 = pneg %p283
        %p522 = pneg %p280
        %p523 = pneg %p304
        %p524 = pneg %p301
        %p525 = pneg %p325
        %p526 = pneg %p322
        %p527 = pneg %p346
        %p528 = pneg %p343
        %p529 = pneg %p367
        %p530 = pneg %p364
        %p531 = pneg %p388
        %p532 = pneg %p385
        %p533 = pneg %p414
        %p534 = pneg %p411
        %s535 = sand.u32 %s401, 1
        %s536 = scalar_lea.sflag [#allocation5], %s535
        %s537 = sand.u32 %s401, 1
        %s538 = smul.addr %s537, 8
        %s539 = scalar_lea.vmem [#allocation4], %s538
        %p540 = scmp.lt.s32.totalorder %s31, 1
        %s541 = scalar_select %p540, %s31, 1
        %s542 = smul.addr %s541, 4
        %s543 = scalar_lea.vmem %s0, %s542
        %544 = vst [vmem:[#allocation2] sm:$0xff] 0.0
        %545 = vst [vmem:[#allocation2 + $0x10] sm:$0xff] 0.0
        %vm546 = vcmask 130048
        %547 = vst.msk [vmem:[#allocation3] sm:$0xff] %vm546, 0.0
        %548 = vst.msk [vmem:[#allocation3 + $0x8] sm:$0xff] %vm546, 0.0
        %549 = vst.msk [vmem:[#allocation3 + $0x10] sm:$0xff] %vm546, 0.0
        %550 = vst.msk [vmem:[#allocation3 + $0x18] sm:$0xff] %vm546, 0.0
        %551 = vst.msk [vmem:[#allocation3 + $0x20] sm:$0xff] %vm546, 0.0
        %552 = vst.msk [vmem:[#allocation3 + $0x28] sm:$0xff] %vm546, 0.0
        %v553 = vld [vmem:[%s543] sm:$0xf]
        %vm554 = vcmask 125952
        %555 = vst.msk [vmem:[#allocation2 + $0x8] sm:$0xf] %vm554, %v553
        %v556 = vld [vmem:[#allocation2] sm:$0xf]
        %v557 = vld [vmem:[#allocation2 + $0x8] sm:$0xf]
        %560 = vrot.lane.b32.xlu0 %v556, 2
        %v561 = vpop.permute.xlu0 %560
        %562 = vrot.lane.b32.xlu0 %v557, 2
        %v563 = vpop.permute.xlu0 %562
        %vm564 = vcmask 15360
        %v565 = vsel %vm564, %v561, %v563
        %567 = vst.msk [vmem:[#allocation3] sm:$0xf] %vm554, %v565
        %v568 = vld [vmem:[#allocation2] sm:$0xf]
        %v569 = vld [vmem:[#allocation2 + $0x8] sm:$0xf]
        %572 = vrot.lane.b32.xlu0 %v568, 1
        %v573 = vpop.permute.xlu0 %572
        %574 = vrot.lane.b32.xlu0 %v569, 1
        %v575 = vpop.permute.xlu0 %574
        %vm576 = vcmask 7168
        %v577 = vsel %vm576, %v573, %v575
        %579 = vst.msk [vmem:[#allocation3 + $0x8] sm:$0xf] %vm554, %v577
        %580 = vst.msk [vmem:[#allocation3 + $0x10] sm:$0xf] %vm554, %v553
        %v581 = vld [vmem:[%s1] sm:$0xff]
        %v582 = vld [vmem:[%s1 + $0x8] sm:$0xff]
        %v583 = vld [vmem:[#allocation3] sm:$0xff]
        %v584 = vld [vmem:[#allocation3 + $0x8] sm:$0xff]
        %v585 = vld [vmem:[#allocation3 + $0x10] sm:$0xff]
        %v586 = vld [vmem:[%s2] sm:$0xff]
        %v587 = vld [vmem:[%s2 + $0x8] sm:$0xff]
        %589 = vset.pattern.permute.xlu0 0
        %590 = vperm.xlu0 %589, %v586
        %v591 = vpop.permute.xlu0 %590
        %594 = vset.pattern.permute.xlu0 0
        %595 = vperm.xlu0 %594, %v587
        %v596 = vpop.permute.xlu0 %595
        %vm598 = vcmask 195584
        %v600 = vsel %vm598, %v581, 0
        %v603 = vsel %vm598, %v582, 0
        %605 = vmatpush.msra.mxu0 0.0
        %606 = vmatpush.msra.mxu0 0.0
        %607 = vmatpush.msra.mxu0 0.0
        %608 = vmatpush.msra.mxu0 0.0
        %609 = vmatpush.msra.mxu0 0.0
        %610 = vmatpush.msra.mxu0 0.0
        %611 = vmatpush.msra.mxu0 0.0
        %612 = vmatpush.msra.mxu0 0.0
        %613 = vmatpush.msra.mxu0 0.0
        %614 = vmatpush.msra.mxu0 0.0
        %615 = vmatpush.msra.mxu0 0.0
        %616 = vmatpush.msra.mxu0 0.0
        %617 = vmatpush.msra.mxu0 0.0
        %618 = vmatpush.msra.mxu0 %v585
        %619 = vmatpush.msra.mxu0 %v584
        %620 = vmatpush.msra.mxu0 %v583
        %621 = vmatmul.f32.gmra.mxu0 %v600
        %v622 = vpop.f32.mrf.mxu0
        %v623 = vadd.f32 %v591, %v622
        %624 = vmatmul.f32.gmra.mxu0 %v603
        %v625 = vpop.f32.mrf.mxu0
        %v626 = vadd.f32 %v596, %v625
        %627 = vdwg.mxu0
        %vm628 = vcmp.ge.f32.partialorder %v623, 0.0
        %vm629 = vcmp.ge.f32.partialorder %v626, 0.0
        %v630 = vmul.f32 %v623, 0.01
        %v631 = vmul.f32 %v626, 0.01
        %v632 = vsel %vm628, %v623, %v630
        %v633 = vsel %vm629, %v626, %v631
        %634 = vst.msk [vmem:[#allocation2 + $0x8] sm:$0xff] %vm546, %v632
        %635 = vst.msk [vmem:[#allocation2 + $0x18] sm:$0xff] %vm546, %v633
        %v636 = vld [vmem:[#allocation2] sm:$0xff]
        %v637 = vld [vmem:[#allocation2 + $0x8] sm:$0xff]
        %v638 = vld [vmem:[#allocation2 + $0x10] sm:$0xff]
        %v639 = vld [vmem:[#allocation2 + $0x18] sm:$0xff]
        %644 = vrot.lane.b32.xlu0 %v636, 2
        %v645 = vpop.permute.xlu0 %644
        %646 = vrot.lane.b32.xlu0 %v637, 2
        %v647 = vpop.permute.xlu0 %646
        %648 = vrot.lane.b32.xlu0 %v638, 2
        %v649 = vpop.permute.xlu0 %648
        %650 = vrot.lane.b32.xlu0 %v639, 2
        %v651 = vpop.permute.xlu0 %650
        %v652 = vsel %vm564, %v645, %v647
        %v653 = vsel %vm564, %v649, %v651
        %656 = vst.msk [vmem:[#allocation3] sm:$0xff] %vm546, %v652
        %657 = vst.msk [vmem:[#allocation3 + $0x8] sm:$0xff] %vm546, %v653
        %v658 = vld [vmem:[#allocation2] sm:$0xff]
        %v659 = vld [vmem:[#allocation2 + $0x8] sm:$0xff]
        %v660 = vld [vmem:[#allocation2 + $0x10] sm:$0xff]
        %v661 = vld [vmem:[#allocation2 + $0x18] sm:$0xff]
        %666 = vrot.lane.b32.xlu0 %v658, 1
        %v667 = vpop.permute.xlu0 %666
        %668 = vrot.lane.b32.xlu0 %v659, 1
        %v669 = vpop.permute.xlu0 %668
        %670 = vrot.lane.b32.xlu0 %v660, 1
        %v671 = vpop.permute.xlu0 %670
        %672 = vrot.lane.b32.xlu0 %v661, 1
        %v673 = vpop.permute.xlu0 %672
        %v674 = vsel %vm576, %v667, %v669
        %v675 = vsel %vm576, %v671, %v673
        %678 = vst.msk [vmem:[#allocation3 + $0x10] sm:$0xff] %vm546, %v674
        %679 = vst.msk [vmem:[#allocation3 + $0x18] sm:$0xff] %vm546, %v675
        %680 = vst.msk [vmem:[#allocation3 + $0x20] sm:$0xff] %vm546, %v632
        %681 = vst.msk [vmem:[#allocation3 + $0x28] sm:$0xff] %vm546, %v633
        %v682 = vld [vmem:[%s3] sm:$0xff]
        %v683 = vld [vmem:[%s3 + $0x8] sm:$0xff]
        %v684 = vld [vmem:[#allocation3] sm:$0xff]
        %v685 = vld [vmem:[#allocation3 + $0x8] sm:$0xff]
        %v686 = vld [vmem:[#allocation3 + $0x10] sm:$0xff]
        %v687 = vld [vmem:[#allocation3 + $0x18] sm:$0xff]
        %v688 = vld [vmem:[#allocation3 + $0x20] sm:$0xff]
        %v689 = vld [vmem:[#allocation3 + $0x28] sm:$0xff]
        %v690 = vld [vmem:[%s4] sm:$0xff]
        %v691 = vld [vmem:[%s4 + $0x8] sm:$0xff]
        %693 = vset.pattern.permute.xlu0 0
        %694 = vperm.xlu0 %693, %v690
        %v695 = vpop.permute.xlu0 %694
        %698 = vset.pattern.permute.xlu0 0
        %699 = vperm.xlu0 %698, %v691
        %v700 = vpop.permute.xlu0 %699
        %vm702 = vcmask 392192
        %v704 = vsel %vm702, %v682, 0
        %v707 = vsel %vm702, %v683, 0
        %709 = vmatpush.msra.mxu0 0.0
        %710 = vmatpush.msra.mxu0 0.0
        %711 = vmatpush.msra.mxu0 0.0
        %712 = vmatpush.msra.mxu0 0.0
        %713 = vmatpush.msra.mxu0 0.0
        %714 = vmatpush.msra.mxu0 0.0
        %715 = vmatpush.msra.mxu0 0.0
        %716 = vmatpush.msra.mxu0 0.0
        %717 = vmatpush.msra.mxu0 0.0
        %718 = vmatpush.msra.mxu0 0.0
        %719 = vmatpush.msra.mxu0 %v689
        %720 = vmatpush.msra.mxu0 %v688
        %721 = vmatpush.msra.mxu0 %v687
        %722 = vmatpush.msra.mxu0 %v686
        %723 = vmatpush.msra.mxu0 %v685
        %724 = vmatpush.msra.mxu0 %v684
        %725 = vmatmul.f32.gmra.mxu0 %v704
        %v726 = vpop.f32.mrf.mxu0
        %v727 = vadd.f32 %v695, %v726
        %728 = vmatmul.f32.gmra.mxu0 %v707
        %v729 = vpop.f32.mrf.mxu0
        %v730 = vadd.f32 %v700, %v729
        %731 = vdwg.mxu0
        %vm732 = vcmp.ge.f32.partialorder %v727, 0.0
        %vm733 = vcmp.ge.f32.partialorder %v730, 0.0
        %v734 = vmul.f32 %v727, 0.01
        %v735 = vmul.f32 %v730, 0.01
        %v736 = vsel %vm732, %v727, %v734
        %v737 = vsel %vm733, %v730, %v735
        %v738 = vld [vmem:[%s5] sm:$0xff]
        %v739 = vld [vmem:[%s5 + $0x8] sm:$0xff]
        %vm740 = vcmask 31744
        %v742 = vsel %vm740, %v738, 0
        %v745 = vsel %vm740, %v739, 0
        %vm747 = vcmask 1043456
        %v749 = vsel %vm747, %v553, 0
        %751 = vmatpush.msra.mxu0 0.0
        %752 = vmatpush.msra.mxu0 0.0
        %753 = vmatpush.msra.mxu0 0.0
        %754 = vmatpush.msra.mxu0 0.0
        %755 = vmatpush.msra.mxu0 0.0
        %756 = vmatpush.msra.mxu0 0.0
        %757 = vmatpush.msra.mxu0 0.0
        %758 = vmatpush.msra.mxu0 0.0
        %759 = vmatpush.msra.mxu0 0.0
        %760 = vmatpush.msra.mxu0 0.0
        %761 = vmatpush.msra.mxu0 0.0
        %762 = vmatpush.msra.mxu0 0.0
        %763 = vmatpush.msra.mxu0 0.0
        %764 = vmatpush.msra.mxu0 0.0
        %765 = vmatpush.msra.mxu0 0.0
        %766 = vmatpush.msra.mxu0 %v749
        %767 = vmatmul.f32.gmra.mxu0 %v742
        %v768 = vpop.f32.mrf.mxu0
        %v769 = vadd.f32 0.0, %v768
        %770 = vmatmul.f32.gmra.mxu0 %v745
        %v771 = vpop.f32.mrf.mxu0
        %v772 = vadd.f32 0.0, %v771
        %773 = vdwg.mxu0
        %v774 = vadd.f32 %v736, %v769
        %v775 = vadd.f32 %v737, %v772
        %v776 = vld [vmem:[%s6] sm:$0xff]
        %v777 = vld [vmem:[%s6 + $0x8] sm:$0xff]
        %779 = vset.pattern.permute.xlu0 0
        %780 = vperm.xlu0 %779, %v776
        %v781 = vpop.permute.xlu0 %780
        %784 = vset.pattern.permute.xlu0 0
        %785 = vperm.xlu0 %784, %v777
        %v786 = vpop.permute.xlu0 %785
        %v788 = vadd.f32 %v774, %v781
        %v789 = vadd.f32 %v775, %v786
        %790 = vst.msk [vmem:[#allocation2 + $0x8] sm:$0xff] %vm546, %v788
        %791 = vst.msk [vmem:[#allocation2 + $0x18] sm:$0xff] %vm546, %v789
        %v792 = vld [vmem:[#allocation2] sm:$0xff]
        %v793 = vld [vmem:[#allocation2 + $0x8] sm:$0xff]
        %v794 = vld [vmem:[#allocation2 + $0x10] sm:$0xff]
        %v795 = vld [vmem:[#allocation2 + $0x18] sm:$0xff]
        %800 = vrot.lane.b32.xlu0 %v792, 4
        %v801 = vpop.permute.xlu0 %800
        %802 = vrot.lane.b32.xlu0 %v793, 4
        %v803 = vpop.permute.xlu0 %802
        %804 = vrot.lane.b32.xlu0 %v794, 4
        %v805 = vpop.permute.xlu0 %804
        %806 = vrot.lane.b32.xlu0 %v795, 4
        %v807 = vpop.permute.xlu0 %806
        %v808 = vsel %vm740, %v801, %v803
        %v809 = vsel %vm740, %v805, %v807
        %812 = vst.msk [vmem:[#allocation3] sm:$0xff] %vm546, %v808
        %813 = vst.msk [vmem:[#allocation3 + $0x8] sm:$0xff] %vm546, %v809
        %v814 = vld [vmem:[#allocation2] sm:$0xff]
        %v815 = vld [vmem:[#allocation2 + $0x8] sm:$0xff]
        %v816 = vld [vmem:[#allocation2 + $0x10] sm:$0xff]
        %v817 = vld [vmem:[#allocation2 + $0x18] sm:$0xff]
        %822 = vrot.lane.b32.xlu0 %v814, 2
        %v823 = vpop.permute.xlu0 %822
        %824 = vrot.lane.b32.xlu0 %v815, 2
        %v825 = vpop.permute.xlu0 %824
        %826 = vrot.lane.b32.xlu0 %v816, 2
        %v827 = vpop.permute.xlu0 %826
        %828 = vrot.lane.b32.xlu0 %v817, 2
        %v829 = vpop.permute.xlu0 %828
        %v830 = vsel %vm564, %v823, %v825
        %v831 = vsel %vm564, %v827, %v829
        %834 = vst.msk [vmem:[#allocation3 + $0x10] sm:$0xff] %vm546, %v830
        %835 = vst.msk [vmem:[#allocation3 + $0x18] sm:$0xff] %vm546, %v831
        %836 = vst.msk [vmem:[#allocation3 + $0x20] sm:$0xff] %vm546, %v788
        %837 = vst.msk [vmem:[#allocation3 + $0x28] sm:$0xff] %vm546, %v789
        %v838 = vld [vmem:[%s7] sm:$0xff]
        %v839 = vld [vmem:[%s7 + $0x8] sm:$0xff]
        %v840 = vld [vmem:[#allocation3] sm:$0xff]
        %v841 = vld [vmem:[#allocation3 + $0x8] sm:$0xff]
        %v842 = vld [vmem:[#allocation3 + $0x10] sm:$0xff]
        %v843 = vld [vmem:[#allocation3 + $0x18] sm:$0xff]
        %v844 = vld [vmem:[#allocation3 + $0x20] sm:$0xff]
        %v845 = vld [vmem:[#allocation3 + $0x28] sm:$0xff]
        %v846 = vld [vmem:[%s8] sm:$0xff]
        %v847 = vld [vmem:[%s8 + $0x8] sm:$0xff]
        %849 = vset.pattern.permute.xlu0 0
        %850 = vperm.xlu0 %849, %v846
        %v851 = vpop.permute.xlu0 %850
        %854 = vset.pattern.permute.xlu0 0
        %855 = vperm.xlu0 %854, %v847
        %v856 = vpop.permute.xlu0 %855
        %v859 = vsel %vm702, %v838, 0
        %v862 = vsel %vm702, %v839, 0
        %864 = vmatpush.msra.mxu0 0.0
        %865 = vmatpush.msra.mxu0 0.0
        %866 = vmatpush.msra.mxu0 0.0
        %867 = vmatpush.msra.mxu0 0.0
        %868 = vmatpush.msra.mxu0 0.0
        %869 = vmatpush.msra.mxu0 0.0
        %870 = vmatpush.msra.mxu0 0.0
        %871 = vmatpush.msra.mxu0 0.0
        %872 = vmatpush.msra.mxu0 0.0
        %873 = vmatpush.msra.mxu0 0.0
        %874 = vmatpush.msra.mxu0 %v845
        %875 = vmatpush.msra.mxu0 %v844
        %876 = vmatpush.msra.mxu0 %v843
        %877 = vmatpush.msra.mxu0 %v842
        %878 = vmatpush.msra.mxu0 %v841
        %879 = vmatpush.msra.mxu0 %v840
        %880 = vmatmul.f32.gmra.mxu0 %v859
        %v881 = vpop.f32.mrf.mxu0
        %v882 = vadd.f32 %v851, %v881
        %883 = vmatmul.f32.gmra.mxu0 %v862
        %v884 = vpop.f32.mrf.mxu0
        %v885 = vadd.f32 %v856, %v884
        %886 = vdwg.mxu0
        %vm887 = vcmp.ge.f32.partialorder %v882, 0.0
        %vm888 = vcmp.ge.f32.partialorder %v885, 0.0
        %v889 = vmul.f32 %v882, 0.01
        %v890 = vmul.f32 %v885, 0.01
        %v891 = vsel %vm887, %v882, %v889
        %v892 = vsel %vm888, %v885, %v890
        %893 = vst.msk [vmem:[#allocation2 + $0x8] sm:$0xff] %vm546, %v891
        %894 = vst.msk [vmem:[#allocation2 + $0x18] sm:$0xff] %vm546, %v892
        %v895 = vld [vmem:[#allocation2] sm:$0xff]
        %v896 = vld [vmem:[#allocation2 + $0x8] sm:$0xff]
        %v897 = vld [vmem:[#allocation2 + $0x10] sm:$0xff]
        %v898 = vld [vmem:[#allocation2 + $0x18] sm:$0xff]
        %903 = vrot.lane.b32.xlu0 %v895, 4
        %v904 = vpop.permute.xlu0 %903
        %905 = vrot.lane.b32.xlu0 %v896, 4
        %v906 = vpop.permute.xlu0 %905
        %907 = vrot.lane.b32.xlu0 %v897, 4
        %v908 = vpop.permute.xlu0 %907
        %909 = vrot.lane.b32.xlu0 %v898, 4
        %v910 = vpop.permute.xlu0 %909
        %v911 = vsel %vm740, %v904, %v906
        %v912 = vsel %vm740, %v908, %v910
        %915 = vst.msk [vmem:[#allocation3] sm:$0xff] %vm546, %v911
        %916 = vst.msk [vmem:[#allocation3 + $0x8] sm:$0xff] %vm546, %v912
        %v917 = vld [vmem:[#allocation2] sm:$0xff]
        %v918 = vld [vmem:[#allocation2 + $0x8] sm:$0xff]
        %v919 = vld [vmem:[#allocation2 + $0x10] sm:$0xff]
        %v920 = vld [vmem:[#allocation2 + $0x18] sm:$0xff]
        %925 = vrot.lane.b32.xlu0 %v917, 2
        %v926 = vpop.permute.xlu0 %925
        %927 = vrot.lane.b32.xlu0 %v918, 2
        %v928 = vpop.permute.xlu0 %927
        %929 = vrot.lane.b32.xlu0 %v919, 2
        %v930 = vpop.permute.xlu0 %929
        %931 = vrot.lane.b32.xlu0 %v920, 2
        %v932 = vpop.permute.xlu0 %931
        %v933 = vsel %vm564, %v926, %v928
        %v934 = vsel %vm564, %v930, %v932
        %937 = vst.msk [vmem:[#allocation3 + $0x10] sm:$0xff] %vm546, %v933
        %938 = vst.msk [vmem:[#allocation3 + $0x18] sm:$0xff] %vm546, %v934
        %939 = vst.msk [vmem:[#allocation3 + $0x20] sm:$0xff] %vm546, %v891
        %940 = vst.msk [vmem:[#allocation3 + $0x28] sm:$0xff] %vm546, %v892
        %v941 = vld [vmem:[%s9] sm:$0xff]
        %v942 = vld [vmem:[%s9 + $0x8] sm:$0xff]
        %v943 = vld [vmem:[#allocation3] sm:$0xff]
        %v944 = vld [vmem:[#allocation3 + $0x8] sm:$0xff]
        %v945 = vld [vmem:[#allocation3 + $0x10] sm:$0xff]
        %v946 = vld [vmem:[#allocation3 + $0x18] sm:$0xff]
        %v947 = vld [vmem:[#allocation3 + $0x20] sm:$0xff]
        %v948 = vld [vmem:[#allocation3 + $0x28] sm:$0xff]
        %v949 = vld [vmem:[%s10] sm:$0xff]
        %v950 = vld [vmem:[%s10 + $0x8] sm:$0xff]
        %952 = vset.pattern.permute.xlu0 0
        %953 = vperm.xlu0 %952, %v949
        %v954 = vpop.permute.xlu0 %953
        %957 = vset.pattern.permute.xlu0 0
        %958 = vperm.xlu0 %957, %v950
        %v959 = vpop.permute.xlu0 %958
        %v962 = vsel %vm702, %v941, 0
        %v965 = vsel %vm702, %v942, 0
        %967 = vmatpush.msra.mxu0 0.0
        %968 = vmatpush.msra.mxu0 0.0
        %969 = vmatpush.msra.mxu0 0.0
        %970 = vmatpush.msra.mxu0 0.0
        %971 = vmatpush.msra.mxu0 0.0
        %972 = vmatpush.msra.mxu0 0.0
        %973 = vmatpush.msra.mxu0 0.0
        %974 = vmatpush.msra.mxu0 0.0
        %975 = vmatpush.msra.mxu0 0.0
        %976 = vmatpush.msra.mxu0 0.0
        %977 = vmatpush.msra.mxu0 %v948
        %978 = vmatpush.msra.mxu0 %v947
        %979 = vmatpush.msra.mxu0 %v946
        %980 = vmatpush.msra.mxu0 %v945
        %981 = vmatpush.msra.mxu0 %v944
        %982 = vmatpush.msra.mxu0 %v943
        %983 = vmatmul.f32.gmra.mxu0 %v962
        %v984 = vpop.f32.mrf.mxu0
        %v985 = vadd.f32 %v954, %v984
        %986 = vmatmul.f32.gmra.mxu0 %v965
        %v987 = vpop.f32.mrf.mxu0
        %v988 = vadd.f32 %v959, %v987
        %989 = vdwg.mxu0
        %vm990 = vcmp.ge.f32.partialorder %v985, 0.0
        %vm991 = vcmp.ge.f32.partialorder %v988, 0.0
        %v992 = vmul.f32 %v985, 0.01
        %v993 = vmul.f32 %v988, 0.01
        %v994 = vsel %vm990, %v985, %v992
        %v995 = vsel %vm991, %v988, %v993
        %v996 = vadd.f32 %v994, %v788
        %v997 = vadd.f32 %v995, %v789
        %998 = vst.msk [vmem:[#allocation2 + $0x8] sm:$0xff] %vm546, %v996
        %999 = vst.msk [vmem:[#allocation2 + $0x18] sm:$0xff] %vm546, %v997
        %v1000 = vld [vmem:[#allocation2] sm:$0xff]
        %v1001 = vld [vmem:[#allocation2 + $0x8] sm:$0xff]
        %v1002 = vld [vmem:[#allocation2 + $0x10] sm:$0xff]
        %v1003 = vld [vmem:[#allocation2 + $0x18] sm:$0xff]
        %1008 = vrot.lane.b32.xlu0 %v1000, 8
        %v1009 = vpop.permute.xlu0 %1008
        %1010 = vrot.lane.b32.xlu0 %v1001, 8
        %v1011 = vpop.permute.xlu0 %1010
        %1012 = vrot.lane.b32.xlu0 %v1002, 8
        %v1013 = vpop.permute.xlu0 %1012
        %1014 = vrot.lane.b32.xlu0 %v1003, 8
        %v1015 = vpop.permute.xlu0 %1014
        %vm1016 = vcmask 64512
        %v1017 = vsel %vm1016, %v1009, %v1011
        %v1018 = vsel %vm1016, %v1013, %v1015
        %1021 = vst.msk [vmem:[#allocation3] sm:$0xff] %vm546, %v1017
        %1022 = vst.msk [vmem:[#allocation3 + $0x8] sm:$0xff] %vm546, %v1018
        %v1023 = vld [vmem:[#allocation2] sm:$0xff]
        %v1024 = vld [vmem:[#allocation2 + $0x8] sm:$0xff]
        %v1025 = vld [vmem:[#allocation2 + $0x10] sm:$0xff]
        %v1026 = vld [vmem:[#allocation2 + $0x18] sm:$0xff]
        %1031 = vrot.lane.b32.xlu0 %v1023, 4
        %v1032 = vpop.permute.xlu0 %1031
        %1033 = vrot.lane.b32.xlu0 %v1024, 4
        %v1034 = vpop.permute.xlu0 %1033
        %1035 = vrot.lane.b32.xlu0 %v1025, 4
        %v1036 = vpop.permute.xlu0 %1035
        %1037 = vrot.lane.b32.xlu0 %v1026, 4
        %v1038 = vpop.permute.xlu0 %1037
        %v1039 = vsel %vm740, %v1032, %v1034
        %v1040 = vsel %vm740, %v1036, %v1038
        %1043 = vst.msk [vmem:[#allocation3 + $0x10] sm:$0xff] %vm546, %v1039
        %1044 = vst.msk [vmem:[#allocation3 + $0x18] sm:$0xff] %vm546, %v1040
        %1045 = vst.msk [vmem:[#allocation3 + $0x20] sm:$0xff] %vm546, %v996
        %1046 = vst.msk [vmem:[#allocation3 + $0x28] sm:$0xff] %vm546, %v997
        %v1047 = vld [vmem:[%s11] sm:$0xff]
        %v1048 = vld [vmem:[#allocation3] sm:$0xff]
        %v1049 = vld [vmem:[#allocation3 + $0x8] sm:$0xff]
        %v1050 = vld [vmem:[#allocation3 + $0x10] sm:$0xff]
        %v1051 = vld [vmem:[#allocation3 + $0x18] sm:$0xff]
        %v1052 = vld [vmem:[#allocation3 + $0x20] sm:$0xff]
        %v1053 = vld [vmem:[#allocation3 + $0x28] sm:$0xff]
        %v1054 = vld [vmem:[%s12] sm:$0xff]
        %1056 = vset.pattern.permute.xlu0 0
        %1057 = vperm.xlu0 %1056, %v1054
        %v1058 = vpop.permute.xlu0 %1057
        %v1061 = vsel %vm702, %v1047, 0
        %1063 = vmatpush.msra.mxu0 0.0
        %1064 = vmatpush.msra.mxu0 0.0
        %1065 = vmatpush.msra.mxu0 0.0
        %1066 = vmatpush.msra.mxu0 0.0
        %1067 = vmatpush.msra.mxu0 0.0
        %1068 = vmatpush.msra.mxu0 0.0
        %1069 = vmatpush.msra.mxu0 0.0
        %1070 = vmatpush.msra.mxu0 0.0
        %1071 = vmatpush.msra.mxu0 0.0
        %1072 = vmatpush.msra.mxu0 0.0
        %1073 = vmatpush.msra.mxu0 %v1053
        %1074 = vmatpush.msra.mxu0 %v1052
        %1075 = vmatpush.msra.mxu0 %v1051
        %1076 = vmatpush.msra.mxu0 %v1050
        %1077 = vmatpush.msra.mxu0 %v1049
        %1078 = vmatpush.msra.mxu0 %v1048
        %1079 = vmatmul.f32.gmra.mxu0 %v1061
        %v1080 = vpop.f32.mrf.mxu0
        %v1081 = vadd.f32 %v1058, %v1080
        %1082 = vdwg.mxu0
        %vm1083 = vcmp.ge.f32.partialorder %v1081, 0.0
        %v1084 = vmul.f32 %v1081, 0.01
        %v1085 = vsel %vm1083, %v1081, %v1084
        %1086 = vst.msk [vmem:[#allocation2 + $0x8] sm:$0xff] %vm546, %v1085
        %v1087 = vld [vmem:[#allocation2] sm:$0xff]
        %v1088 = vld [vmem:[#allocation2 + $0x8] sm:$0xff]
        %1091 = vrot.lane.b32.xlu0 %v1087, 8
        %v1092 = vpop.permute.xlu0 %1091
        %1093 = vrot.lane.b32.xlu0 %v1088, 8
        %v1094 = vpop.permute.xlu0 %1093
        %v1095 = vsel %vm1016, %v1092, %v1094
        %1097 = vst.msk [vmem:[#allocation3] sm:$0xff] %vm546, %v1095
        %v1098 = vld [vmem:[#allocation2] sm:$0xff]
        %v1099 = vld [vmem:[#allocation2 + $0x8] sm:$0xff]
        %1102 = vrot.lane.b32.xlu0 %v1098, 4
        %v1103 = vpop.permute.xlu0 %1102
        %1104 = vrot.lane.b32.xlu0 %v1099, 4
        %v1105 = vpop.permute.xlu0 %1104
        %v1106 = vsel %vm740, %v1103, %v1105
        %1108 = vst.msk [vmem:[#allocation3 + $0x8] sm:$0xff] %vm546, %v1106
        %1109 = vst.msk [vmem:[#allocation3 + $0x10] sm:$0xff] %vm546, %v1085
        %v1110 = vld [vmem:[%s13] sm:$0xff]
        %v1111 = vld [vmem:[#allocation3] sm:$0xff]
        %v1112 = vld [vmem:[#allocation3 + $0x8] sm:$0xff]
        %v1113 = vld [vmem:[#allocation3 + $0x10] sm:$0xff]
        %v1114 = vld [vmem:[%s14] sm:$0xff]
        %1116 = vset.pattern.permute.xlu0 0
        %1117 = vperm.xlu0 %1116, %v1114
        %v1118 = vpop.permute.xlu0 %1117
        %v1121 = vsel %vm598, %v1110, 0
        %1123 = vmatpush.msra.mxu0 0.0
        %1124 = vmatpush.msra.mxu0 0.0
        %1125 = vmatpush.msra.mxu0 0.0
        %1126 = vmatpush.msra.mxu0 0.0
        %1127 = vmatpush.msra.mxu0 0.0
        %1128 = vmatpush.msra.mxu0 0.0
        %1129 = vmatpush.msra.mxu0 0.0
        %1130 = vmatpush.msra.mxu0 0.0
        %1131 = vmatpush.msra.mxu0 0.0
        %1132 = vmatpush.msra.mxu0 0.0
        %1133 = vmatpush.msra.mxu0 0.0
        %1134 = vmatpush.msra.mxu0 0.0
        %1135 = vmatpush.msra.mxu0 0.0
        %1136 = vmatpush.msra.mxu0 %v1113
        %1137 = vmatpush.msra.mxu0 %v1112
        %1138 = vmatpush.msra.mxu0 %v1111
        %1139 = vmatmul.f32.gmra.mxu0 %v1121
        %v1140 = vpop.f32.mrf.mxu0
        %v1141 = vadd.f32 %v1118, %v1140
        %1142 = vdwg.mxu0
        %vm1143 = vcmp.ge.f32.partialorder %v1141, 0.0
        %v1144 = vmul.f32 %v1141, 0.01
        %v1145 = vsel %vm1143, %v1141, %v1144
        %v1146 = vld [vmem:[%s15] sm:$0xff]
        %v1148 = vsel %vm546, %v1146, 0
        %1150 = vmatpush.msra.mxu0 0.0
        %1151 = vmatpush.msra.mxu0 0.0
        %1152 = vmatpush.msra.mxu0 0.0
        %1153 = vmatpush.msra.mxu0 0.0
        %1154 = vmatpush.msra.mxu0 0.0
        %1155 = vmatpush.msra.mxu0 0.0
        %1156 = vmatpush.msra.mxu0 0.0
        %1157 = vmatpush.msra.mxu0 0.0
        %1158 = vmatpush.msra.mxu0 0.0
        %1159 = vmatpush.msra.mxu0 0.0
        %1160 = vmatpush.msra.mxu0 0.0
        %1161 = vmatpush.msra.mxu0 0.0
        %1162 = vmatpush.msra.mxu0 0.0
        %1163 = vmatpush.msra.mxu0 0.0
        %1164 = vmatpush.msra.mxu0 %v997
        %1165 = vmatpush.msra.mxu0 %v996
        %1166 = vmatmul.f32.gmra.mxu0 %v1148
        %v1167 = vpop.f32.mrf.mxu0
        %v1168 = vadd.f32 0.0, %v1167
        %1169 = vdwg.mxu0
        %v1170 = vadd.f32 %v1145, %v1168
        %v1171 = vld [vmem:[%s16] sm:$0xff]
        %1173 = vset.pattern.permute.xlu0 0
        %1174 = vperm.xlu0 %1173, %v1171
        %v1175 = vpop.permute.xlu0 %1174
        %v1177 = vadd.f32 %v1170, %v1175
        %1178 = vst.msk [vmem:[%s539] sm:$0xff] %vm546, %v1177
        %s1179 = sand.u32 %s401, 1
        %s1180 = scalar_lea.sflag [#allocation5], %s1179
        %s1181 = sand.u32 %s401, 1
        %s1182 = smul.addr %s1181, 8
        %s1183 = scalar_lea.vmem [#allocation4], %s1182
        // Predicated region
        $region89: #{tpu_custom_call.1} parent=87 // pred_check
          %p1184 = pneg %p411
        $region90: #{tpu_custom_call.1} parent=87 // pred_check_branch
          %1186 = sbr.rel (%p1184) target = $region92
        $region91: #{tpu_custom_call.1} parent=87 // pred_region
          %1188 = vsyncadd %s1180, 0
          %s1189 = smul.addr %s31, 8
          %s1190 = scalar_lea.hbm %s17, %s1189
          %s1192 = sshll.u32 %s1183, 4
          %s1193 = int_to_ptr.vmem [resolvable:$true] %s1192
          %s1194 = sshll.u32 %s1190, 4
          %s1195 = int_to_ptr.hbm [resolvable:$true] %s1194
          %1197 = dma.vmem_to_hbm [thread:$0]  %s1193, 128, %s1195, %s1180
        $region92: #{tpu_custom_call.1} parent=87 // pred_fallthru
          _
      $region88: #{tpu_custom_call.1} parent=5 // pred_fallthru
        _
      %p1198 = scmp.le.s32.totalorder 2, %s26
      // Predicated region
      $region93: #{tpu_custom_call.1} parent=5 // pred_check
        %p1199 = pneg %p1198
      $region94: #{tpu_custom_call.1} parent=5 // pred_check_branch
        %1201 = sbr.rel (%p1199) target = $region96
      $region95: #{tpu_custom_call.1} parent=5 // pred_region
        %s1202 = ssub.s32 %s26, 2
        // Predicated region
        $region97: #{tpu_custom_call.1} parent=95 // pred_check
          %p1203 = pneg %p417
        $region98: #{tpu_custom_call.1} parent=95 // pred_check_branch
          %1205 = sbr.rel (%p1203) target = $region100
        $region99: #{tpu_custom_call.1} parent=95 // pred_region
          %s1206 = sand.u32 %s402, 1
          %s1207 = scalar_lea.sflag [#allocation5], %s1206
          %s1208 = sand.u32 %s402, 1
          %s1209 = smul.addr %s1208, 8
          %s1210 = scalar_lea.vmem [#allocation4], %s1209
          %1212 = dma.done %s1207, 128
        $region100: #{tpu_custom_call.1} parent=95 // pred_fallthru
          _
      $region96: #{tpu_custom_call.1} parent=5 // pred_fallthru
        _
    $region6: #{tpu_custom_call.1} parent=1 // loop_footer
      %s30 = sadd.s32 1, %s26
    $region7: #{tpu_custom_call.1} parent=1 // loop_footer_branch
      %25 = sbr.rel target = $region3
    $region8: #{tpu_custom_call.1} parent=1 // loop_exit
      _
    %1213 = vsyncpa [#allocation5], 1
    %s1214 = scalar_lea.sflag [#allocation5], 1
    %1215 = vsyncpa %s1214, 1

</llo_original>
